<compile_context>
chip_gen: v6e
topology: v6e:2x2x1
jax: 0.10.0
libtpu: 0.0.40
codegen_flags: <defaults>
</compile_context>

<pallas_src>
import jax
import jax.numpy as jnp
from jax.experimental import pallas as pl
from jax.experimental.pallas import tpu as pltpu


LANE = 128


def _round_up(x, m):
    return (x + m - 1) // m * m


def _hardswish(x):
    # x * relu6(x + 3) / 6  -- mul/min/max only, no divide.
    return jnp.minimum(jnp.maximum(x + 3.0, 0.0), 6.0) * (1.0 / 6.0) * x


def critic_twin_shared_kernel(
    sa_ref,      # [TB, SA]   bf16   fused (state, action) tile
    w0_ref,      # [SA, Mp]   bf16
    b0_ref,      # [1,  Mp]   f32
    w1_ref,      # [Mp, Mp]   bf16
    b1_ref,      # [1,  Mp]   f32
    w2h_ref,     # [Mp, M2p]  bf16   (rows of w2 multiplying h)
    w2d1_ref,    # [Mp, M2p]  bf16   (rows of w2 multiplying d1)
    b2_ref,      # [1,  M2p]  f32
    wqh_ref,     # [Mp, 128]  bf16   col0=q1, col1=q2
    wqd1_ref,    # [Mp, 128]  bf16
    wqd2_ref,    # [M2p,128]  bf16
    bq_ref,      # [1,  128]  f32
    q_ref,       # [TB, 128]  f32    lane-dense output (cols 0/1 are q1/q2)
):
    sa = sa_ref[...]

    # h = ReLU([state, action] @ w0 + b0)
    h = jnp.dot(sa, w0_ref[...], preferred_element_type=jnp.float32) + b0_ref[...]
    h = jnp.maximum(h, 0.0)
    h_b = h.astype(jnp.bfloat16)

    # d1 = HardSwish(h @ w1 + b1)
    d1 = jnp.dot(h_b, w1_ref[...], preferred_element_type=jnp.float32) + b1_ref[...]
    d1 = _hardswish(d1)
    d1_b = d1.astype(jnp.bfloat16)

    # d2 = HardSwish([h, d1] @ w2 + b2)  ==  HardSwish(h @ w2_h + d1 @ w2_d1 + b2)
    d2 = (jnp.dot(h_b, w2h_ref[...], preferred_element_type=jnp.float32)
          + jnp.dot(d1_b, w2d1_ref[...], preferred_element_type=jnp.float32)
          + b2_ref[...])
    d2 = _hardswish(d2)
    d2_b = d2.astype(jnp.bfloat16)

    # Twin readout on the (otherwise idle) MXU: one lane-dense [TB,128] result.
    q = (jnp.dot(h_b, wqh_ref[...], preferred_element_type=jnp.float32)
         + jnp.dot(d1_b, wqd1_ref[...], preferred_element_type=jnp.float32)
         + jnp.dot(d2_b, wqd2_ref[...], preferred_element_type=jnp.float32)
         + bq_ref[...])
    q_ref[...] = q.astype(q_ref.dtype)


_PACKED_ORDER = (
    "w0", "b0",
    "w1", "b1",
    "w2_h", "w2_d1", "b2",
    "wq_h", "wq_d1", "wq_d2", "bq",
)


def _choose_tb(B, SA, Mp, M2p):
    """Batch tile: multiple of 8, >=2 tiles when possible (v7x megacore), sized to
    ~6 MiB of activations / <=1024 rows to amortize per-grid-step overhead."""
    rows8 = _round_up(B, 8)
    # Approx per-row activation bytes: f32+bf16 copies of h, d1, d2 plus in/out tiles.
    per_row = 6 * (2 * Mp + M2p) + 2 * SA + 8 * LANE
    tb_cap = max(8, min(1024, (6 << 20) // max(per_row, 1) // 8 * 8))
    if rows8 >= 16:
        tb = min(tb_cap, max(8, _round_up(rows8 // 2, 8)))
    else:
        tb = rows8
    return tb


def _vmem_cap_bytes():
    try:
        cap = int(pltpu.get_tpu_info().vmem_capacity_bytes)
    except Exception:
        cap = 64 * 1024 * 1024
    return int(0.85 * cap)


def _build_call(TB, Bp, SA, Mp, M2p, weight_args, single_buffer_weights):
    grid = (Bp // TB,)

    if single_buffer_weights:
        w_specs = [
            pl.BlockSpec(w.shape, lambda i: (0, 0), pipeline_mode=pl.Buffered(1))
            for w in weight_args
        ]
        buf_factor = 1
    else:
        w_specs = [pl.BlockSpec(w.shape, lambda i: (0, 0)) for w in weight_args]
        buf_factor = 2

    in_specs = [pl.BlockSpec((TB, SA), lambda i: (i, 0))] + w_specs
    out_specs = pl.BlockSpec((TB, LANE), lambda i: (i, 0))

    param_bytes = sum(int(v.size) * v.dtype.itemsize for v in weight_args)
    in_tile_bytes = 2 * TB * SA             # bf16 input tile
    out_tile_bytes = 4 * TB * LANE          # f32 output tile
    act_bytes = TB * 6 * (2 * Mp + M2p)     # f32 + bf16 copies of h, d1, d2

    vmem_bytes = (buf_factor * param_bytes
                  + 2 * (in_tile_bytes + out_tile_bytes)
                  + act_bytes
                  + (4 << 20))              # headroom for Mosaic internal scratch
    vmem_bytes = int(min(max(vmem_bytes, 16 << 20), _vmem_cap_bytes()))

    flops = int(2 * Bp * (SA * Mp + Mp * Mp + 2 * Mp * M2p + (2 * Mp + M2p) * LANE))
    bytes_accessed = int(param_bytes + 2 * Bp * SA + 4 * Bp * LANE)
    cost = pl.CostEstimate(flops=flops, transcendentals=0,
                           bytes_accessed=bytes_accessed)

    return pl.pallas_call(
        critic_twin_shared_kernel,
        out_shape=jax.ShapeDtypeStruct((Bp, LANE), jnp.float32),
        grid=grid,
        in_specs=in_specs,
        out_specs=out_specs,
        compiler_params=pltpu.CompilerParams(
            dimension_semantics=("parallel",),
            vmem_limit_bytes=vmem_bytes),
        cost_estimate=cost,
    )


def critic_twin_shared_get_q1_q2(state, action, packed):
    """Pallas-backed twin-critic evaluation. Returns (q1, q2), each [B, 1] f32."""
    B, S = state.shape
    A = action.shape[1]
    SA = S + A
    Mp = packed["w1"].shape[0]
    M2p = packed["b2"].shape[1]

    # Fuse state/action once in the wrapper and stream bf16 (halves HBM bytes).
    sa = jnp.concatenate(
        [state.astype(jnp.float32), action.astype(jnp.float32)], axis=1
    ).astype(jnp.bfloat16)

    TB = _choose_tb(B, SA, Mp, M2p)
    Bp = _round_up(_round_up(B, 8), TB)
    if Bp != B:
        sa = jnp.pad(sa, ((0, Bp - B), (0, 0)))

    weight_args = tuple(packed[k] for k in _PACKED_ORDER)

    try:
        q_all = _build_call(TB, Bp, SA, Mp, M2p, weight_args,
                            single_buffer_weights=True)(sa, *weight_args)
    except Exception:
        # TODO(synk): drop this fallback once pl.Buffered(1) single-buffering is
        #             guaranteed on all deployed jax versions.
        q_all = _build_call(TB, Bp, SA, Mp, M2p, weight_args,
                            single_buffer_weights=False)(sa, *weight_args)

    return q_all[:B, 0:1], q_all[:B, 1:2]


def critic_twin_shared_forward(state, action, packed):
    """Matches the module's `forward(state, action)`: returns q1 only."""
    q1, _ = critic_twin_shared_get_q1_q2(state, action, packed)
    return q1


def init_params(key, state_dim, action_dim, mid_dim):
    """Synthetic params with the module's shapes. Linear weights stored as
    [in, out] (pre-transposed vs. PyTorch's [out, in])."""
    in_dim = state_dim + action_dim
    ks = jax.random.split(key, 5)

    def w(k, fan_in, fan_out, scale):
        return scale * jax.random.normal(k, (fan_in, fan_out), jnp.float32)

    return {
        "w0": w(ks[0], in_dim, mid_dim, 1.0 / jnp.sqrt(in_dim)),
        "b0": jnp.zeros((1, mid_dim), jnp.float32),
        "w1": w(ks[1], mid_dim, mid_dim, 1.0 / jnp.sqrt(mid_dim)),
        "b1": jnp.full((1, mid_dim), 1e-6, jnp.float32),
        "w2": w(ks[2], 2 * mid_dim, 2 * mid_dim, 1.0 / jnp.sqrt(2 * mid_dim)),
        "b2": jnp.full((1, 2 * mid_dim), 1e-6, jnp.float32),
        "wq1": w(ks[3], 4 * mid_dim, 1, 1.0 / jnp.sqrt(4 * mid_dim)),
        "bq1": jnp.zeros((1, 1), jnp.float32),
        "wq2": w(ks[4], 4 * mid_dim, 1, 1.0 / jnp.sqrt(4 * mid_dim)),
        "bq2": jnp.zeros((1, 1), jnp.float32),
    }


def pack_params(params, state_dim, action_dim, mid_dim, lane=LANE):
    """Concat-free split, lane-pad feature dims to multiples of 128, cast MXU
    operands to bf16 (biases stay f32), and pack the twin readout vectors into
    lane-dense [.,128] matrices (col 0 = q1, col 1 = q2). Zero padding is
    semantically neutral (relu(0)=hardswish(0)=0, pad weights = 0)."""
    S, A, M = state_dim, action_dim, mid_dim
    SA = S + A
    Mp = _round_up(M, lane)
    M2p = _round_up(2 * M, lane)
    bf16 = jnp.bfloat16

    def pad2(w, rows, cols):
        return jnp.pad(w, ((0, rows - w.shape[0]), (0, cols - w.shape[1])))

    w0, w1, w2 = params["w0"], params["w1"], params["w2"]
    wq1, wq2 = params["wq1"], params["wq2"]           # each [4M, 1]

    def q_block(lo, hi, rows):
        blk = jnp.concatenate([wq1[lo:hi], wq2[lo:hi]], axis=1)   # [hi-lo, 2]
        return pad2(blk, rows, lane).astype(bf16)

    bq = jnp.zeros((1, lane), jnp.float32)
    bq = bq.at[0, 0].set(params["bq1"][0, 0]).at[0, 1].set(params["bq2"][0, 0])

    return {
        "w0": pad2(w0, SA, Mp).astype(bf16),
        "b0": pad2(params["b0"], 1, Mp),
        "w1": pad2(w1, Mp, Mp).astype(bf16),
        "b1": pad2(params["b1"], 1, Mp),
        "w2_h": pad2(w2[:M], Mp, M2p).astype(bf16),
        "w2_d1": pad2(w2[M:], Mp, M2p).astype(bf16),
        "b2": pad2(params["b2"], 1, M2p),
        "wq_h": q_block(0, M, Mp),
        "wq_d1": q_block(M, 2 * M, Mp),
        "wq_d2": q_block(2 * M, 4 * M, M2p),
        "bq": bq,
    }


def _reference_packed(state, action, p):
    """Pure-JAX mirror of the kernel math (same packed params, same bf16 casts)."""
    f32 = jnp.float32
    sa = jnp.concatenate([state, action], axis=1).astype(jnp.bfloat16)
    h = jnp.maximum(jnp.dot(sa, p["w0"], preferred_element_type=f32) + p["b0"], 0.0)
    hb = h.astype(jnp.bfloat16)
    d1 = _hardswish(jnp.dot(hb, p["w1"], preferred_element_type=f32) + p["b1"])
    d1b = d1.astype(jnp.bfloat16)
    d2 = _hardswish(jnp.dot(hb, p["w2_h"], preferred_element_type=f32)
                    + jnp.dot(d1b, p["w2_d1"], preferred_element_type=f32) + p["b2"])
    d2b = d2.astype(jnp.bfloat16)
    q = (jnp.dot(hb, p["wq_h"], preferred_element_type=f32)
         + jnp.dot(d1b, p["wq_d1"], preferred_element_type=f32)
         + jnp.dot(d2b, p["wq_d2"], preferred_element_type=f32)
         + p["bq"])
    return q[:, 0:1], q[:, 1:2]


def _reference_f32(state, action, params):
    """Full-f32 reference with the original (concat-based) structure."""
    x = jnp.concatenate([state, action], axis=1)
    h = jnp.maximum(x @ params["w0"] + params["b0"], 0.0)
    d1 = _hardswish(h @ params["w1"] + params["b1"])
    x2 = jnp.concatenate([h, d1], axis=1)
    d2 = _hardswish(x2 @ params["w2"] + params["b2"])
    x3 = jnp.concatenate([x2, d2], axis=1)
    return (x3 @ params["wq1"] + params["bq1"],
            x3 @ params["wq2"] + params["bq2"])


if __name__ == "__main__":
    # Small shapes; batch=24 exercises padding + a 2-tile grid (both TCs on v7x).
    batch, state_dim, action_dim, mid_dim = 24, 16, 8, 32

    key = jax.random.PRNGKey(0)
    k_state, k_action, k_params = jax.random.split(key, 3)
    state = jax.random.normal(k_state, (batch, state_dim), jnp.float32)
    action = jax.random.normal(k_action, (batch, action_dim), jnp.float32)

    params = init_params(k_params, state_dim, action_dim, mid_dim)
    packed = pack_params(params, state_dim, action_dim, mid_dim)

    q1, q2 = critic_twin_shared_get_q1_q2(state, action, packed)
    jax.block_until_ready((q1, q2))
    q1_fwd = critic_twin_shared_forward(state, action, packed)
    jax.block_until_ready(q1_fwd)

    assert q1.shape == (batch, 1) and q2.shape == (batch, 1)
    assert q1_fwd.shape == (batch, 1)

    # Exact-path check vs matched (bf16-in / f32-acc) reference.
    q1_m, q2_m = _reference_packed(state, action, packed)
    assert jnp.allclose(q1, q1_m, atol=2e-3, rtol=2e-3)
    assert jnp.allclose(q2, q2_m, atol=2e-3, rtol=2e-3)
    assert jnp.allclose(q1_fwd, q1_m, atol=2e-3, rtol=2e-3)

    # Packing/padding sanity vs the original full-f32 structure (loose: bf16 weights).
    q1_f, q2_f = _reference_f32(state, action, params)
    assert jnp.allclose(q1, q1_f, atol=1e-1, rtol=1e-1)
    assert jnp.allclose(q2, q2_f, atol=1e-1, rtol=1e-1)

    print("KERNEL_OK")
</pallas_src>

<mosaic_0001>
module attributes {stable_mosaic.version = 11 : i64} {
  func.func @critic_twin_shared_kernel(%arg0: i32, %arg1: memref<16x24xbf16, #tpu.memory_space<vmem>>, %arg2: memref<24x128xbf16, #tpu.memory_space<vmem>>, %arg3: memref<1x128xf32, #tpu.memory_space<vmem>>, %arg4: memref<128x128xbf16, #tpu.memory_space<vmem>>, %arg5: memref<1x128xf32, #tpu.memory_space<vmem>>, %arg6: memref<128x128xbf16, #tpu.memory_space<vmem>>, %arg7: memref<128x128xbf16, #tpu.memory_space<vmem>>, %arg8: memref<1x128xf32, #tpu.memory_space<vmem>>, %arg9: memref<128x128xbf16, #tpu.memory_space<vmem>>, %arg10: memref<128x128xbf16, #tpu.memory_space<vmem>>, %arg11: memref<128x128xbf16, #tpu.memory_space<vmem>>, %arg12: memref<1x128xf32, #tpu.memory_space<vmem>>, %arg13: memref<16x128xf32, #tpu.memory_space<vmem>>) attributes {dimension_semantics = [#tpu.dimension_semantics<parallel>], iteration_bounds = array<i64: 2>, scalar_prefetch = 0 : i64, scratch_operands = 0 : i64, tpu.core_type = #tpu.core_type<tc>, window_params = [{transform_indices = @transform_0, window_bounds = array<i64: 16, 24>}, {pipeline_mode = #tpu.pipeline_mode<synchronous>, transform_indices = @transform_1, window_bounds = array<i64: 24, 128>}, {pipeline_mode = #tpu.pipeline_mode<synchronous>, transform_indices = @transform_2, window_bounds = array<i64: 1, 128>}, {pipeline_mode = #tpu.pipeline_mode<synchronous>, transform_indices = @transform_3, window_bounds = array<i64: 128, 128>}, {pipeline_mode = #tpu.pipeline_mode<synchronous>, transform_indices = @transform_4, window_bounds = array<i64: 1, 128>}, {pipeline_mode = #tpu.pipeline_mode<synchronous>, transform_indices = @transform_5, window_bounds = array<i64: 128, 128>}, {pipeline_mode = #tpu.pipeline_mode<synchronous>, transform_indices = @transform_6, window_bounds = array<i64: 128, 128>}, {pipeline_mode = #tpu.pipeline_mode<synchronous>, transform_indices = @transform_7, window_bounds = array<i64: 1, 128>}, {pipeline_mode = #tpu.pipeline_mode<synchronous>, transform_indices = @transform_8, window_bounds = array<i64: 128, 128>}, {pipeline_mode = #tpu.pipeline_mode<synchronous>, transform_indices = @transform_9, window_bounds = array<i64: 128, 128>}, {pipeline_mode = #tpu.pipeline_mode<synchronous>, transform_indices = @transform_10, window_bounds = array<i64: 128, 128>}, {pipeline_mode = #tpu.pipeline_mode<synchronous>, transform_indices = @transform_11, window_bounds = array<i64: 1, 128>}, {transform_indices = @transform_12, window_bounds = array<i64: 16, 128>}]} {
    %c0 = arith.constant 0 : index
    %c0_0 = arith.constant 0 : index
    %0 = vector.load %arg1[%c0, %c0_0] : memref<16x24xbf16, #tpu.memory_space<vmem>>, vector<16x24xbf16>
    %c0_1 = arith.constant 0 : index
    %c0_2 = arith.constant 0 : index
    %1 = vector.load %arg2[%c0_1, %c0_2] : memref<24x128xbf16, #tpu.memory_space<vmem>>, vector<24x128xbf16>
    %cst = arith.constant dense<0.000000e+00> : vector<16x128xf32>
    %2 = tpu.matmul %0, %1, %cst {dimension_numbers = #tpu.dot_dimension_numbers<[1], [0], [0], [1], [0, 0, 1, 1], [], []>} : vector<16x24xbf16>, vector<24x128xbf16>, vector<16x128xf32> -> vector<16x128xf32>
    %c0_3 = arith.constant 0 : index
    %c0_4 = arith.constant 0 : index
    %3 = vector.load %arg3[%c0_3, %c0_4] : memref<1x128xf32, #tpu.memory_space<vmem>>, vector<1x128xf32>
    %4 = vector.broadcast %3 : vector<1x128xf32> to vector<16x128xf32>
    %5 = arith.addf %2, %4 : vector<16x128xf32>
    %cst_5 = arith.constant 0.000000e+00 : f32
    %6 = vector.broadcast %cst_5 : f32 to vector<16x128xf32>
    %7 = arith.maximumf %5, %6 : vector<16x128xf32>
    %8 = arith.truncf %7 : vector<16x128xf32> to vector<16x128xbf16>
    %c0_6 = arith.constant 0 : index
    %c0_7 = arith.constant 0 : index
    %9 = vector.load %arg4[%c0_6, %c0_7] : memref<128x128xbf16, #tpu.memory_space<vmem>>, vector<128x128xbf16>
    %cst_8 = arith.constant dense<0.000000e+00> : vector<16x128xf32>
    %10 = tpu.matmul %8, %9, %cst_8 {dimension_numbers = #tpu.dot_dimension_numbers<[1], [0], [0], [1], [0, 0, 1, 1], [], []>} : vector<16x128xbf16>, vector<128x128xbf16>, vector<16x128xf32> -> vector<16x128xf32>
    %c0_9 = arith.constant 0 : index
    %c0_10 = arith.constant 0 : index
    %11 = vector.load %arg5[%c0_9, %c0_10] : memref<1x128xf32, #tpu.memory_space<vmem>>, vector<1x128xf32>
    %12 = vector.broadcast %11 : vector<1x128xf32> to vector<16x128xf32>
    %13 = arith.addf %10, %12 : vector<16x128xf32>
    %cst_11 = arith.constant 3.000000e+00 : f32
    %14 = vector.broadcast %cst_11 : f32 to vector<16x128xf32>
    %15 = arith.addf %13, %14 : vector<16x128xf32>
    %cst_12 = arith.constant 0.000000e+00 : f32
    %16 = vector.broadcast %cst_12 : f32 to vector<16x128xf32>
    %17 = arith.maximumf %15, %16 : vector<16x128xf32>
    %cst_13 = arith.constant 6.000000e+00 : f32
    %18 = vector.broadcast %cst_13 : f32 to vector<16x128xf32>
    %19 = arith.minimumf %17, %18 : vector<16x128xf32>
    %cst_14 = arith.constant 0.166666672 : f32
    %20 = vector.broadcast %cst_14 : f32 to vector<16x128xf32>
    %21 = arith.mulf %19, %20 : vector<16x128xf32>
    %22 = arith.mulf %21, %13 : vector<16x128xf32>
    %23 = arith.truncf %22 : vector<16x128xf32> to vector<16x128xbf16>
    %c0_15 = arith.constant 0 : index
    %c0_16 = arith.constant 0 : index
    %24 = vector.load %arg6[%c0_15, %c0_16] : memref<128x128xbf16, #tpu.memory_space<vmem>>, vector<128x128xbf16>
    %cst_17 = arith.constant dense<0.000000e+00> : vector<16x128xf32>
    %25 = tpu.matmul %8, %24, %cst_17 {dimension_numbers = #tpu.dot_dimension_numbers<[1], [0], [0], [1], [0, 0, 1, 1], [], []>} : vector<16x128xbf16>, vector<128x128xbf16>, vector<16x128xf32> -> vector<16x128xf32>
    %c0_18 = arith.constant 0 : index
    %c0_19 = arith.constant 0 : index
    %26 = vector.load %arg7[%c0_18, %c0_19] : memref<128x128xbf16, #tpu.memory_space<vmem>>, vector<128x128xbf16>
    %cst_20 = arith.constant dense<0.000000e+00> : vector<16x128xf32>
    %27 = tpu.matmul %23, %26, %cst_20 {dimension_numbers = #tpu.dot_dimension_numbers<[1], [0], [0], [1], [0, 0, 1, 1], [], []>} : vector<16x128xbf16>, vector<128x128xbf16>, vector<16x128xf32> -> vector<16x128xf32>
    %28 = arith.addf %25, %27 : vector<16x128xf32>
    %c0_21 = arith.constant 0 : index
    %c0_22 = arith.constant 0 : index
    %29 = vector.load %arg8[%c0_21, %c0_22] : memref<1x128xf32, #tpu.memory_space<vmem>>, vector<1x128xf32>
    %30 = vector.broadcast %29 : vector<1x128xf32> to vector<16x128xf32>
    %31 = arith.addf %28, %30 : vector<16x128xf32>
    %cst_23 = arith.constant 3.000000e+00 : f32
    %32 = vector.broadcast %cst_23 : f32 to vector<16x128xf32>
    %33 = arith.addf %31, %32 : vector<16x128xf32>
    %cst_24 = arith.constant 0.000000e+00 : f32
    %34 = vector.broadcast %cst_24 : f32 to vector<16x128xf32>
    %35 = arith.maximumf %33, %34 : vector<16x128xf32>
    %cst_25 = arith.constant 6.000000e+00 : f32
    %36 = vector.broadcast %cst_25 : f32 to vector<16x128xf32>
    %37 = arith.minimumf %35, %36 : vector<16x128xf32>
    %cst_26 = arith.constant 0.166666672 : f32
    %38 = vector.broadcast %cst_26 : f32 to vector<16x128xf32>
    %39 = arith.mulf %37, %38 : vector<16x128xf32>
    %40 = arith.mulf %39, %31 : vector<16x128xf32>
    %41 = arith.truncf %40 : vector<16x128xf32> to vector<16x128xbf16>
    %c0_27 = arith.constant 0 : index
    %c0_28 = arith.constant 0 : index
    %42 = vector.load %arg9[%c0_27, %c0_28] : memref<128x128xbf16, #tpu.memory_space<vmem>>, vector<128x128xbf16>
    %cst_29 = arith.constant dense<0.000000e+00> : vector<16x128xf32>
    %43 = tpu.matmul %8, %42, %cst_29 {dimension_numbers = #tpu.dot_dimension_numbers<[1], [0], [0], [1], [0, 0, 1, 1], [], []>} : vector<16x128xbf16>, vector<128x128xbf16>, vector<16x128xf32> -> vector<16x128xf32>
    %c0_30 = arith.constant 0 : index
    %c0_31 = arith.constant 0 : index
    %44 = vector.load %arg10[%c0_30, %c0_31] : memref<128x128xbf16, #tpu.memory_space<vmem>>, vector<128x128xbf16>
    %cst_32 = arith.constant dense<0.000000e+00> : vector<16x128xf32>
    %45 = tpu.matmul %23, %44, %cst_32 {dimension_numbers = #tpu.dot_dimension_numbers<[1], [0], [0], [1], [0, 0, 1, 1], [], []>} : vector<16x128xbf16>, vector<128x128xbf16>, vector<16x128xf32> -> vector<16x128xf32>
    %46 = arith.addf %43, %45 : vector<16x128xf32>
    %c0_33 = arith.constant 0 : index
    %c0_34 = arith.constant 0 : index
    %47 = vector.load %arg11[%c0_33, %c0_34] : memref<128x128xbf16, #tpu.memory_space<vmem>>, vector<128x128xbf16>
    %cst_35 = arith.constant dense<0.000000e+00> : vector<16x128xf32>
    %48 = tpu.matmul %41, %47, %cst_35 {dimension_numbers = #tpu.dot_dimension_numbers<[1], [0], [0], [1], [0, 0, 1, 1], [], []>} : vector<16x128xbf16>, vector<128x128xbf16>, vector<16x128xf32> -> vector<16x128xf32>
    %49 = arith.addf %46, %48 : vector<16x128xf32>
    %c0_36 = arith.constant 0 : index
    %c0_37 = arith.constant 0 : index
    %50 = vector.load %arg12[%c0_36, %c0_37] : memref<1x128xf32, #tpu.memory_space<vmem>>, vector<1x128xf32>
    %51 = vector.broadcast %50 : vector<1x128xf32> to vector<16x128xf32>
    %52 = arith.addf %49, %51 : vector<16x128xf32>
    %c0_38 = arith.constant 0 : index
    %c0_39 = arith.constant 0 : index
    %53 = vector.load %arg13[%c0_38, %c0_39] : memref<16x128xf32, #tpu.memory_space<vmem>>, vector<16x128xf32>
    tpu.vector_store %arg13[%c0_38, %c0_39], %52 {strides = array<i32>} : memref<16x128xf32, #tpu.memory_space<vmem>>, vector<16x128xf32>,
    return
  }
  func.func @transform_0(%arg0: i32) -> (i32, i32) {
    %c0_i32 = arith.constant 0 : i32
    %c0_i32_0 = arith.constant 0 : i32
    return %arg0, %c0_i32 : i32, i32
  }
  func.func @transform_1(%arg0: i32) -> (i32, i32) {
    %c0_i32 = arith.constant 0 : i32
    %c0_i32_0 = arith.constant 0 : i32
    %c0_i32_1 = arith.constant 0 : i32
    return %c0_i32, %c0_i32_0 : i32, i32
  }
  func.func @transform_2(%arg0: i32) -> (i32, i32) {
    %c0_i32 = arith.constant 0 : i32
    %c0_i32_0 = arith.constant 0 : i32
    %c0_i32_1 = arith.constant 0 : i32
    return %c0_i32, %c0_i32_0 : i32, i32
  }
  func.func @transform_3(%arg0: i32) -> (i32, i32) {
    %c0_i32 = arith.constant 0 : i32
    %c0_i32_0 = arith.constant 0 : i32
    %c0_i32_1 = arith.constant 0 : i32
    return %c0_i32, %c0_i32_0 : i32, i32
  }
  func.func @transform_4(%arg0: i32) -> (i32, i32) {
    %c0_i32 = arith.constant 0 : i32
    %c0_i32_0 = arith.constant 0 : i32
    %c0_i32_1 = arith.constant 0 : i32
    return %c0_i32, %c0_i32_0 : i32, i32
  }
  func.func @transform_5(%arg0: i32) -> (i32, i32) {
    %c0_i32 = arith.constant 0 : i32
    %c0_i32_0 = arith.constant 0 : i32
    %c0_i32_1 = arith.constant 0 : i32
    return %c0_i32, %c0_i32_0 : i32, i32
  }
  func.func @transform_6(%arg0: i32) -> (i32, i32) {
    %c0_i32 = arith.constant 0 : i32
    %c0_i32_0 = arith.constant 0 : i32
    %c0_i32_1 = arith.constant 0 : i32
    return %c0_i32, %c0_i32_0 : i32, i32
  }
  func.func @transform_7(%arg0: i32) -> (i32, i32) {
    %c0_i32 = arith.constant 0 : i32
    %c0_i32_0 = arith.constant 0 : i32
    %c0_i32_1 = arith.constant 0 : i32
    return %c0_i32, %c0_i32_0 : i32, i32
  }
  func.func @transform_8(%arg0: i32) -> (i32, i32) {
    %c0_i32 = arith.constant 0 : i32
    %c0_i32_0 = arith.constant 0 : i32
    %c0_i32_1 = arith.constant 0 : i32
    return %c0_i32, %c0_i32_0 : i32, i32
  }
  func.func @transform_9(%arg0: i32) -> (i32, i32) {
    %c0_i32 = arith.constant 0 : i32
    %c0_i32_0 = arith.constant 0 : i32
    %c0_i32_1 = arith.constant 0 : i32
    return %c0_i32, %c0_i32_0 : i32, i32
  }
  func.func @transform_10(%arg0: i32) -> (i32, i32) {
    %c0_i32 = arith.constant 0 : i32
    %c0_i32_0 = arith.constant 0 : i32
    %c0_i32_1 = arith.constant 0 : i32
    return %c0_i32, %c0_i32_0 : i32, i32
  }
  func.func @transform_11(%arg0: i32) -> (i32, i32) {
    %c0_i32 = arith.constant 0 : i32
    %c0_i32_0 = arith.constant 0 : i32
    %c0_i32_1 = arith.constant 0 : i32
    return %c0_i32, %c0_i32_0 : i32, i32
  }
  func.func @transform_12(%arg0: i32) -> (i32, i32) {
    %c0_i32 = arith.constant 0 : i32
    %c0_i32_0 = arith.constant 0 : i32
    return %arg0, %c0_i32 : i32, i32
  }
}

module attributes {stable_mosaic.version = 11 : i64} {
  func.func @critic_twin_shared_kernel(%arg0: i32, %arg1: memref<16x24xbf16, #tpu.memory_space<vmem>>, %arg2: memref<24x128xbf16, #tpu.memory_space<vmem>>, %arg3: memref<1x128xf32, #tpu.memory_space<vmem>>, %arg4: memref<128x128xbf16, #tpu.memory_space<vmem>>, %arg5: memref<1x128xf32, #tpu.memory_space<vmem>>, %arg6: memref<128x128xbf16, #tpu.memory_space<vmem>>, %arg7: memref<128x128xbf16, #tpu.memory_space<vmem>>, %arg8: memref<1x128xf32, #tpu.memory_space<vmem>>, %arg9: memref<128x128xbf16, #tpu.memory_space<vmem>>, %arg10: memref<128x128xbf16, #tpu.memory_space<vmem>>, %arg11: memref<128x128xbf16, #tpu.memory_space<vmem>>, %arg12: memref<1x128xf32, #tpu.memory_space<vmem>>, %arg13: memref<16x128xf32, #tpu.memory_space<vmem>>) attributes {dimension_semantics = [#tpu.dimension_semantics<parallel>], iteration_bounds = array<i64: 2>, scalar_prefetch = 0 : i64, scratch_operands = 0 : i64, tpu.core_type = #tpu.core_type<tc>, window_params = [{transform_indices = @transform_0, window_bounds = array<i64: 16, 24>}, {pipeline_mode = #tpu.pipeline_mode<synchronous>, transform_indices = @transform_1, window_bounds = array<i64: 24, 128>}, {pipeline_mode = #tpu.pipeline_mode<synchronous>, transform_indices = @transform_2, window_bounds = array<i64: 1, 128>}, {pipeline_mode = #tpu.pipeline_mode<synchronous>, transform_indices = @transform_3, window_bounds = array<i64: 128, 128>}, {pipeline_mode = #tpu.pipeline_mode<synchronous>, transform_indices = @transform_4, window_bounds = array<i64: 1, 128>}, {pipeline_mode = #tpu.pipeline_mode<synchronous>, transform_indices = @transform_5, window_bounds = array<i64: 128, 128>}, {pipeline_mode = #tpu.pipeline_mode<synchronous>, transform_indices = @transform_6, window_bounds = array<i64: 128, 128>}, {pipeline_mode = #tpu.pipeline_mode<synchronous>, transform_indices = @transform_7, window_bounds = array<i64: 1, 128>}, {pipeline_mode = #tpu.pipeline_mode<synchronous>, transform_indices = @transform_8, window_bounds = array<i64: 128, 128>}, {pipeline_mode = #tpu.pipeline_mode<synchronous>, transform_indices = @transform_9, window_bounds = array<i64: 128, 128>}, {pipeline_mode = #tpu.pipeline_mode<synchronous>, transform_indices = @transform_10, window_bounds = array<i64: 128, 128>}, {pipeline_mode = #tpu.pipeline_mode<synchronous>, transform_indices = @transform_11, window_bounds = array<i64: 1, 128>}, {transform_indices = @transform_12, window_bounds = array<i64: 16, 128>}]} {
    %c0 = arith.constant 0 : index
    %c0_0 = arith.constant 0 : index
    %0 = vector.load %arg1[%c0, %c0_0] : memref<16x24xbf16, #tpu.memory_space<vmem>>, vector<16x24xbf16>
    %c0_1 = arith.constant 0 : index
    %c0_2 = arith.constant 0 : index
    %1 = vector.load %arg2[%c0_1, %c0_2] : memref<24x128xbf16, #tpu.memory_space<vmem>>, vector<24x128xbf16>
    %cst = arith.constant dense<0.000000e+00> : vector<16x128xf32>
    %2 = tpu.matmul %0, %1, %cst {dimension_numbers = #tpu.dot_dimension_numbers<[1], [0], [0], [1], [0, 0, 1, 1], [], []>} : vector<16x24xbf16>, vector<24x128xbf16>, vector<16x128xf32> -> vector<16x128xf32>
    %c0_3 = arith.constant 0 : index
    %c0_4 = arith.constant 0 : index
    %3 = vector.load %arg3[%c0_3, %c0_4] : memref<1x128xf32, #tpu.memory_space<vmem>>, vector<1x128xf32>
    %4 = vector.broadcast %3 : vector<1x128xf32> to vector<16x128xf32>
    %5 = arith.addf %2, %4 : vector<16x128xf32>
    %cst_5 = arith.constant 0.000000e+00 : f32
    %6 = vector.broadcast %cst_5 : f32 to vector<16x128xf32>
    %7 = arith.maximumf %5, %6 : vector<16x128xf32>
    %8 = arith.truncf %7 : vector<16x128xf32> to vector<16x128xbf16>
    %c0_6 = arith.constant 0 : index
    %c0_7 = arith.constant 0 : index
    %9 = vector.load %arg4[%c0_6, %c0_7] : memref<128x128xbf16, #tpu.memory_space<vmem>>, vector<128x128xbf16>
    %cst_8 = arith.constant dense<0.000000e+00> : vector<16x128xf32>
    %10 = tpu.matmul %8, %9, %cst_8 {dimension_numbers = #tpu.dot_dimension_numbers<[1], [0], [0], [1], [0, 0, 1, 1], [], []>} : vector<16x128xbf16>, vector<128x128xbf16>, vector<16x128xf32> -> vector<16x128xf32>
    %c0_9 = arith.constant 0 : index
    %c0_10 = arith.constant 0 : index
    %11 = vector.load %arg5[%c0_9, %c0_10] : memref<1x128xf32, #tpu.memory_space<vmem>>, vector<1x128xf32>
    %12 = vector.broadcast %11 : vector<1x128xf32> to vector<16x128xf32>
    %13 = arith.addf %10, %12 : vector<16x128xf32>
    %cst_11 = arith.constant 3.000000e+00 : f32
    %14 = vector.broadcast %cst_11 : f32 to vector<16x128xf32>
    %15 = arith.addf %13, %14 : vector<16x128xf32>
    %cst_12 = arith.constant 0.000000e+00 : f32
    %16 = vector.broadcast %cst_12 : f32 to vector<16x128xf32>
    %17 = arith.maximumf %15, %16 : vector<16x128xf32>
    %cst_13 = arith.constant 6.000000e+00 : f32
    %18 = vector.broadcast %cst_13 : f32 to vector<16x128xf32>
    %19 = arith.minimumf %17, %18 : vector<16x128xf32>
    %cst_14 = arith.constant 0.166666672 : f32
    %20 = vector.broadcast %cst_14 : f32 to vector<16x128xf32>
    %21 = arith.mulf %19, %20 : vector<16x128xf32>
    %22 = arith.mulf %21, %13 : vector<16x128xf32>
    %23 = arith.truncf %22 : vector<16x128xf32> to vector<16x128xbf16>
    %c0_15 = arith.constant 0 : index
    %c0_16 = arith.constant 0 : index
    %24 = vector.load %arg6[%c0_15, %c0_16] : memref<128x128xbf16, #tpu.memory_space<vmem>>, vector<128x128xbf16>
    %cst_17 = arith.constant dense<0.000000e+00> : vector<16x128xf32>
    %25 = tpu.matmul %8, %24, %cst_17 {dimension_numbers = #tpu.dot_dimension_numbers<[1], [0], [0], [1], [0, 0, 1, 1], [], []>} : vector<16x128xbf16>, vector<128x128xbf16>, vector<16x128xf32> -> vector<16x128xf32>
    %c0_18 = arith.constant 0 : index
    %c0_19 = arith.constant 0 : index
    %26 = vector.load %arg7[%c0_18, %c0_19] : memref<128x128xbf16, #tpu.memory_space<vmem>>, vector<128x128xbf16>
    %cst_20 = arith.constant dense<0.000000e+00> : vector<16x128xf32>
    %27 = tpu.matmul %23, %26, %cst_20 {dimension_numbers = #tpu.dot_dimension_numbers<[1], [0], [0], [1], [0, 0, 1, 1], [], []>} : vector<16x128xbf16>, vector<128x128xbf16>, vector<16x128xf32> -> vector<16x128xf32>
    %28 = arith.addf %25, %27 : vector<16x128xf32>
    %c0_21 = arith.constant 0 : index
    %c0_22 = arith.constant 0 : index
    %29 = vector.load %arg8[%c0_21, %c0_22] : memref<1x128xf32, #tpu.memory_space<vmem>>, vector<1x128xf32>
    %30 = vector.broadcast %29 : vector<1x128xf32> to vector<16x128xf32>
    %31 = arith.addf %28, %30 : vector<16x128xf32>
    %cst_23 = arith.constant 3.000000e+00 : f32
    %32 = vector.broadcast %cst_23 : f32 to vector<16x128xf32>
    %33 = arith.addf %31, %32 : vector<16x128xf32>
    %cst_24 = arith.constant 0.000000e+00 : f32
    %34 = vector.broadcast %cst_24 : f32 to vector<16x128xf32>
    %35 = arith.maximumf %33, %34 : vector<16x128xf32>
    %cst_25 = arith.constant 6.000000e+00 : f32
    %36 = vector.broadcast %cst_25 : f32 to vector<16x128xf32>
    %37 = arith.minimumf %35, %36 : vector<16x128xf32>
    %cst_26 = arith.constant 0.166666672 : f32
    %38 = vector.broadcast %cst_26 : f32 to vector<16x128xf32>
    %39 = arith.mulf %37, %38 : vector<16x128xf32>
    %40 = arith.mulf %39, %31 : vector<16x128xf32>
    %41 = arith.truncf %40 : vector<16x128xf32> to vector<16x128xbf16>
    %c0_27 = arith.constant 0 : index
    %c0_28 = arith.constant 0 : index
    %42 = vector.load %arg9[%c0_27, %c0_28] : memref<128x128xbf16, #tpu.memory_space<vmem>>, vector<128x128xbf16>
    %cst_29 = arith.constant dense<0.000000e+00> : vector<16x128xf32>
    %43 = tpu.matmul %8, %42, %cst_29 {dimension_numbers = #tpu.dot_dimension_numbers<[1], [0], [0], [1], [0, 0, 1, 1], [], []>} : vector<16x128xbf16>, vector<128x128xbf16>, vector<16x128xf32> -> vector<16x128xf32>
    %c0_30 = arith.constant 0 : index
    %c0_31 = arith.constant 0 : index
    %44 = vector.load %arg10[%c0_30, %c0_31] : memref<128x128xbf16, #tpu.memory_space<vmem>>, vector<128x128xbf16>
    %cst_32 = arith.constant dense<0.000000e+00> : vector<16x128xf32>
    %45 = tpu.matmul %23, %44, %cst_32 {dimension_numbers = #tpu.dot_dimension_numbers<[1], [0], [0], [1], [0, 0, 1, 1], [], []>} : vector<16x128xbf16>, vector<128x128xbf16>, vector<16x128xf32> -> vector<16x128xf32>
    %46 = arith.addf %43, %45 : vector<16x128xf32>
    %c0_33 = arith.constant 0 : index
    %c0_34 = arith.constant 0 : index
    %47 = vector.load %arg11[%c0_33, %c0_34] : memref<128x128xbf16, #tpu.memory_space<vmem>>, vector<128x128xbf16>
    %cst_35 = arith.constant dense<0.000000e+00> : vector<16x128xf32>
    %48 = tpu.matmul %41, %47, %cst_35 {dimension_numbers = #tpu.dot_dimension_numbers<[1], [0], [0], [1], [0, 0, 1, 1], [], []>} : vector<16x128xbf16>, vector<128x128xbf16>, vector<16x128xf32> -> vector<16x128xf32>
    %49 = arith.addf %46, %48 : vector<16x128xf32>
    %c0_36 = arith.constant 0 : index
    %c0_37 = arith.constant 0 : index
    %50 = vector.load %arg12[%c0_36, %c0_37] : memref<1x128xf32, #tpu.memory_space<vmem>>, vector<1x128xf32>
    %51 = vector.broadcast %50 : vector<1x128xf32> to vector<16x128xf32>
    %52 = arith.addf %49, %51 : vector<16x128xf32>
    %c0_38 = arith.constant 0 : index
    %c0_39 = arith.constant 0 : index
    %53 = vector.load %arg13[%c0_38, %c0_39] : memref<16x128xf32, #tpu.memory_space<vmem>>, vector<16x128xf32>
    tpu.vector_store %arg13[%c0_38, %c0_39], %52 {strides = array<i32>} : memref<16x128xf32, #tpu.memory_space<vmem>>, vector<16x128xf32>,
    return
  }
  func.func @transform_0(%arg0: i32) -> (i32, i32) {
    %c0_i32 = arith.constant 0 : i32
    %c0_i32_0 = arith.constant 0 : i32
    return %arg0, %c0_i32 : i32, i32
  }
  func.func @transform_1(%arg0: i32) -> (i32, i32) {
    %c0_i32 = arith.constant 0 : i32
    %c0_i32_0 = arith.constant 0 : i32
    %c0_i32_1 = arith.constant 0 : i32
    return %c0_i32, %c0_i32_0 : i32, i32
  }
  func.func @transform_2(%arg0: i32) -> (i32, i32) {
    %c0_i32 = arith.constant 0 : i32
    %c0_i32_0 = arith.constant 0 : i32
    %c0_i32_1 = arith.constant 0 : i32
    return %c0_i32, %c0_i32_0 : i32, i32
  }
  func.func @transform_3(%arg0: i32) -> (i32, i32) {
    %c0_i32 = arith.constant 0 : i32
    %c0_i32_0 = arith.constant 0 : i32
    %c0_i32_1 = arith.constant 0 : i32
    return %c0_i32, %c0_i32_0 : i32, i32
  }
  func.func @transform_4(%arg0: i32) -> (i32, i32) {
    %c0_i32 = arith.constant 0 : i32
    %c0_i32_0 = arith.constant 0 : i32
    %c0_i32_1 = arith.constant 0 : i32
    return %c0_i32, %c0_i32_0 : i32, i32
  }
  func.func @transform_5(%arg0: i32) -> (i32, i32) {
    %c0_i32 = arith.constant 0 : i32
    %c0_i32_0 = arith.constant 0 : i32
    %c0_i32_1 = arith.constant 0 : i32
    return %c0_i32, %c0_i32_0 : i32, i32
  }
  func.func @transform_6(%arg0: i32) -> (i32, i32) {
    %c0_i32 = arith.constant 0 : i32
    %c0_i32_0 = arith.constant 0 : i32
    %c0_i32_1 = arith.constant 0 : i32
    return %c0_i32, %c0_i32_0 : i32, i32
  }
  func.func @transform_7(%arg0: i32) -> (i32, i32) {
    %c0_i32 = arith.constant 0 : i32
    %c0_i32_0 = arith.constant 0 : i32
    %c0_i32_1 = arith.constant 0 : i32
    return %c0_i32, %c0_i32_0 : i32, i32
  }
  func.func @transform_8(%arg0: i32) -> (i32, i32) {
    %c0_i32 = arith.constant 0 : i32
    %c0_i32_0 = arith.constant 0 : i32
    %c0_i32_1 = arith.constant 0 : i32
    return %c0_i32, %c0_i32_0 : i32, i32
  }
  func.func @transform_9(%arg0: i32) -> (i32, i32) {
    %c0_i32 = arith.constant 0 : i32
    %c0_i32_0 = arith.constant 0 : i32
    %c0_i32_1 = arith.constant 0 : i32
    return %c0_i32, %c0_i32_0 : i32, i32
  }
  func.func @transform_10(%arg0: i32) -> (i32, i32) {
    %c0_i32 = arith.constant 0 : i32
    %c0_i32_0 = arith.constant 0 : i32
    %c0_i32_1 = arith.constant 0 : i32
    return %c0_i32, %c0_i32_0 : i32, i32
  }
  func.func @transform_11(%arg0: i32) -> (i32, i32) {
    %c0_i32 = arith.constant 0 : i32
    %c0_i32_0 = arith.constant 0 : i32
    %c0_i32_1 = arith.constant 0 : i32
    return %c0_i32, %c0_i32_0 : i32, i32
  }
  func.func @transform_12(%arg0: i32) -> (i32, i32) {
    %c0_i32 = arith.constant 0 : i32
    %c0_i32_0 = arith.constant 0 : i32
    return %arg0, %c0_i32 : i32, i32
  }
}

</mosaic_0001>

<llo_original>
// kernel: tpu_custom_call.1
$region0: #{tpu_custom_call.1}
  #allocation0 [shape = 'u32[]', space=smem, size = 0x4, offset = 0x4, fixed_abs, tag = 'smem constant byte address 0x4 - core index']
  #allocation1 [shape = 'u32[144,128]{1,0:T(1,128)}', space=vmem, size = 0x12000, scoped, tag = 'internal scratch']
  %s0 = inlined_call_operand.vmem [shape: bf16[32,24], index: 0, kind: input, shape index: {}]
  %s1 = inlined_call_operand.vmem [shape: bf16[24,128], index: 1, kind: input, shape index: {}]
  %s2 = inlined_call_operand.vmem [shape: f32[1,128], index: 2, kind: input, shape index: {}]
  %s3 = inlined_call_operand.hbm [shape: bf16[128,128], index: 3, kind: input, shape index: {}]
  %s4 = inlined_call_operand.vmem [shape: f32[1,128], index: 4, kind: input, shape index: {}]
  %s5 = inlined_call_operand.hbm [shape: bf16[128,128], index: 5, kind: input, shape index: {}]
  %s6 = inlined_call_operand.hbm [shape: bf16[128,128], index: 6, kind: input, shape index: {}]
  %s7 = inlined_call_operand.vmem [shape: f32[1,128], index: 7, kind: input, shape index: {}]
  %s8 = inlined_call_operand.hbm [shape: bf16[128,128], index: 8, kind: input, shape index: {}]
  %s9 = inlined_call_operand.hbm [shape: bf16[128,128], index: 9, kind: input, shape index: {}]
  %s10 = inlined_call_operand.hbm [shape: bf16[128,128], index: 10, kind: input, shape index: {}]
  %s11 = inlined_call_operand.vmem [shape: f32[1,128], index: 11, kind: input, shape index: {}]
  %s12 = inlined_call_operand.hbm [shape: f32[32,128], index: 12, kind: output, shape index: {}]
  %s13 = sld [smem:[#allocation0]]
  $region105: #{tpu_custom_call.1} parent=0
    _
  %s15 = ssub.s32 1, %s13
  %s16 = scalar_select 0, %s15, %s13
  $region1: #{tpu_custom_call.1} parent=0
    #allocation2 [shape = 'u8[32768]{0}', space=vmem, size = 0x8000, scoped, tag = 'input window, operand 3, single buffered']
    #allocation3 [shape = 's32[2]{0}', space=sflag, size = 0x8, scoped, tag = 'scoped memory for tpu_custom_call.1']
    #allocation4 [shape = 's32[2]{0}', space=sflag, size = 0x8, scoped, tag = 'scoped memory for tpu_custom_call.1']
    #allocation5 [shape = 'u8[32768]{0}', space=vmem, size = 0x8000, scoped, tag = 'input window, operand 5, single buffered']
    #allocation6 [shape = 's32[1]{0}', space=sflag, size = 0x4, scoped, tag = 'scoped memory for tpu_custom_call.1']
    #allocation7 [shape = 'u8[32768]{0}', space=vmem, size = 0x8000, scoped, tag = 'input window, operand 6, single buffered']
    #allocation8 [shape = 'u8[32768]{0}', space=vmem, size = 0x8000, scoped, tag = 'input window, operand 8, single buffered']
    #allocation9 [shape = 's32[1]{0}', space=sflag, size = 0x4, scoped, tag = 'scoped memory for tpu_custom_call.1']
    #allocation10 [shape = 'u8[32768]{0}', space=vmem, size = 0x8000, scoped, tag = 'input window, operand 9, single buffered']
    #allocation11 [shape = 'u8[32768]{0}', space=vmem, size = 0x8000, scoped, tag = 'input window, operand 10, single buffered']
    #allocation12 [shape = 's32[1]{0}', space=sflag, size = 0x4, scoped, tag = 'scoped memory for tpu_custom_call.1']
    #allocation13 [shape = 'u8[16384]{0}', space=vmem, size = 0x4000, scoped, tag = 'output window, operand 0']
    %17 = vsyncpa [#allocation3], 0
    %18 = vsyncpa [#allocation6], 0
    %19 = vsyncpa [#allocation9], 0
    %20 = vsyncpa [#allocation12], 0
    %21 = vsyncpa [#allocation4], 0
    %s22 = scalar_lea.sflag [#allocation4], 1
    %23 = vsyncpa %s22, 0
    loop: start=0, step=1, limit=4
    $region2: #{tpu_custom_call.1} parent=1 // loop_pre_header
      _
    $region3: #{tpu_custom_call.1} parent=1 // loop_header
      %s25 = sphi 0, %s29
      %p26 = scmp.ge.s32.totalorder %s25, 4
      %s35 = sphi 0, %s37
      %s38 = sphi 0, %s35
      %s39 = sphi 0, %s38
      %s55 = sphi 0, %s39
      %s59 = sphi 0, %s59
      %s61 = sphi 0, %s59
      %s62 = sphi 0, %s61
      %s76 = sphi 0, %s62
      %s80 = sphi 0, %s80
      %s82 = sphi 0, %s80
      %s83 = sphi 0, %s82
      %s97 = sphi 0, %s83
      %s101 = sphi 0, %s101
      %s103 = sphi 0, %s101
      %s104 = sphi 0, %s103
      %s118 = sphi 0, %s104
      %s122 = sphi 0, %s122
      %s124 = sphi 0, %s122
      %s125 = sphi 0, %s124
      %s139 = sphi 0, %s125
      %s143 = sphi 0, %s143
      %s145 = sphi 0, %s143
      %s146 = sphi 0, %s145
      %s160 = sphi 0, %s146
      %s164 = sphi 0, %s164
      %s166 = sphi 0, %s164
      %s167 = sphi 0, %s166
      %s181 = sphi 0, %s167
      %s185 = sphi 0, %s185
      %s187 = sphi 0, %s185
      %s188 = sphi 0, %s187
      %s202 = sphi 0, %s188
      %s206 = sphi 0, %s206
      %s208 = sphi 0, %s206
      %s209 = sphi 0, %s208
      %s223 = sphi 0, %s209
      %s227 = sphi 0, %s227
      %s229 = sphi 0, %s227
      %s230 = sphi 0, %s229
      %s244 = sphi 0, %s230
      %s248 = sphi 0, %s248
      %s250 = sphi 0, %s248
      %s251 = sphi 0, %s250
      %s265 = sphi 0, %s251
      %s269 = sphi 0, %s269
      %s271 = sphi 0, %s269
      %s272 = sphi 0, %s271
      %s286 = sphi 0, %s272
      %s292 = sphi 0, %s294
      %s295 = sphi 0, %s292
      %s296 = sphi 0, %s295
      %s312 = sphi 0, %s296
    $region4: #{tpu_custom_call.1} parent=1 // loop_header_branch
      %28 = sbr.rel (%p26) target = $region8
    $region5: #{tpu_custom_call.1} parent=1 // loop_body
      %s30 = ssub.s32 %s25, 1
      %s31 = ssub.s32 %s25, 2
      %s32 = sadd.s32 %s25, 1
      %s33 = ssub.s32 %s25, %s32
      %p34 = scmp.eq.s32.totalorder %s33, 0
      %s36 = sadd.s32 %s35, 1
      %s37 = scalar_select %p34, %s35, %s36
      %p40 = pneg %p34
      %p41 = scmp.eq.s32.totalorder %s25, 1
      %p42 = por %p40, %p41
      %p43 = scmp.ne.s32.totalorder %s35, %s38
      %p44 = scmp.eq.s32.totalorder %s25, 0
      %p45 = por %p43, %p44
      %p46 = scmp.ne.s32.totalorder %s35, %s38
      %p47 = scmp.eq.s32.totalorder %s30, 1
      %p48 = por %p46, %p47
      %p49 = scmp.ne.s32.totalorder %s38, %s39
      %p50 = scmp.eq.s32.totalorder %s30, 0
      %p51 = por %p49, %p50
      %p52 = scmp.ne.s32.totalorder %s38, %s39
      %p53 = scmp.eq.s32.totalorder %s31, 1
      %p54 = por %p52, %p53
      %p56 = scmp.ne.s32.totalorder %s39, %s55
      %p57 = scmp.eq.s32.totalorder %s31, 0
      %p58 = por %p56, %p57
      %s60 = sadd.s32 %s59, 1
      %p63 = scmp.eq.s32.totalorder %s25, 1
      %p64 = scmp.ne.s32.totalorder %s59, %s61
      %p65 = scmp.eq.s32.totalorder %s25, 0
      %p66 = por %p64, %p65
      %p67 = scmp.ne.s32.totalorder %s59, %s61
      %p68 = scmp.eq.s32.totalorder %s30, 1
      %p69 = por %p67, %p68
      %p70 = scmp.ne.s32.totalorder %s61, %s62
      %p71 = scmp.eq.s32.totalorder %s30, 0
      %p72 = por %p70, %p71
      %p73 = scmp.ne.s32.totalorder %s61, %s62
      %p74 = scmp.eq.s32.totalorder %s31, 1
      %p75 = por %p73, %p74
      %p77 = scmp.ne.s32.totalorder %s62, %s76
      %p78 = scmp.eq.s32.totalorder %s31, 0
      %p79 = por %p77, %p78
      %s81 = sadd.s32 %s80, 1
      %p84 = scmp.eq.s32.totalorder %s25, 1
      %p85 = scmp.ne.s32.totalorder %s80, %s82
      %p86 = scmp.eq.s32.totalorder %s25, 0
      %p87 = por %p85, %p86
      %p88 = scmp.ne.s32.totalorder %s80, %s82
      %p89 = scmp.eq.s32.totalorder %s30, 1
      %p90 = por %p88, %p89
      %p91 = scmp.ne.s32.totalorder %s82, %s83
      %p92 = scmp.eq.s32.totalorder %s30, 0
      %p93 = por %p91, %p92
      %p94 = scmp.ne.s32.totalorder %s82, %s83
      %p95 = scmp.eq.s32.totalorder %s31, 1
      %p96 = por %p94, %p95
      %p98 = scmp.ne.s32.totalorder %s83, %s97
      %p99 = scmp.eq.s32.totalorder %s31, 0
      %p100 = por %p98, %p99
      %s102 = sadd.s32 %s101, 1
      %p105 = scmp.eq.s32.totalorder %s25, 1
      %p106 = scmp.ne.s32.totalorder %s101, %s103
      %p107 = scmp.eq.s32.totalorder %s25, 0
      %p108 = por %p106, %p107
      %p109 = scmp.ne.s32.totalorder %s101, %s103
      %p110 = scmp.eq.s32.totalorder %s30, 1
      %p111 = por %p109, %p110
      %p112 = scmp.ne.s32.totalorder %s103, %s104
      %p113 = scmp.eq.s32.totalorder %s30, 0
      %p114 = por %p112, %p113
      %p115 = scmp.ne.s32.totalorder %s103, %s104
      %p116 = scmp.eq.s32.totalorder %s31, 1
      %p117 = por %p115, %p116
      %p119 = scmp.ne.s32.totalorder %s104, %s118
      %p120 = scmp.eq.s32.totalorder %s31, 0
      %p121 = por %p119, %p120
      %s123 = sadd.s32 %s122, 1
      %p126 = scmp.eq.s32.totalorder %s25, 1
      %p127 = scmp.ne.s32.totalorder %s122, %s124
      %p128 = scmp.eq.s32.totalorder %s25, 0
      %p129 = por %p127, %p128
      %p130 = scmp.ne.s32.totalorder %s122, %s124
      %p131 = scmp.eq.s32.totalorder %s30, 1
      %p132 = por %p130, %p131
      %p133 = scmp.ne.s32.totalorder %s124, %s125
      %p134 = scmp.eq.s32.totalorder %s30, 0
      %p135 = por %p133, %p134
      %p136 = scmp.ne.s32.totalorder %s124, %s125
      %p137 = scmp.eq.s32.totalorder %s31, 1
      %p138 = por %p136, %p137
      %p140 = scmp.ne.s32.totalorder %s125, %s139
      %p141 = scmp.eq.s32.totalorder %s31, 0
      %p142 = por %p140, %p141
      %s144 = sadd.s32 %s143, 1
      %p147 = scmp.eq.s32.totalorder %s25, 1
      %p148 = scmp.ne.s32.totalorder %s143, %s145
      %p149 = scmp.eq.s32.totalorder %s25, 0
      %p150 = por %p148, %p149
      %p151 = scmp.ne.s32.totalorder %s143, %s145
      %p152 = scmp.eq.s32.totalorder %s30, 1
      %p153 = por %p151, %p152
      %p154 = scmp.ne.s32.totalorder %s145, %s146
      %p155 = scmp.eq.s32.totalorder %s30, 0
      %p156 = por %p154, %p155
      %p157 = scmp.ne.s32.totalorder %s145, %s146
      %p158 = scmp.eq.s32.totalorder %s31, 1
      %p159 = por %p157, %p158
      %p161 = scmp.ne.s32.totalorder %s146, %s160
      %p162 = scmp.eq.s32.totalorder %s31, 0
      %p163 = por %p161, %p162
      %s165 = sadd.s32 %s164, 1
      %p168 = scmp.eq.s32.totalorder %s25, 1
      %p169 = scmp.ne.s32.totalorder %s164, %s166
      %p170 = scmp.eq.s32.totalorder %s25, 0
      %p171 = por %p169, %p170
      %p172 = scmp.ne.s32.totalorder %s164, %s166
      %p173 = scmp.eq.s32.totalorder %s30, 1
      %p174 = por %p172, %p173
      %p175 = scmp.ne.s32.totalorder %s166, %s167
      %p176 = scmp.eq.s32.totalorder %s30, 0
      %p177 = por %p175, %p176
      %p178 = scmp.ne.s32.totalorder %s166, %s167
      %p179 = scmp.eq.s32.totalorder %s31, 1
      %p180 = por %p178, %p179
      %p182 = scmp.ne.s32.totalorder %s167, %s181
      %p183 = scmp.eq.s32.totalorder %s31, 0
      %p184 = por %p182, %p183
      %s186 = sadd.s32 %s185, 1
      %p189 = scmp.eq.s32.totalorder %s25, 1
      %p190 = scmp.ne.s32.totalorder %s185, %s187
      %p191 = scmp.eq.s32.totalorder %s25, 0
      %p192 = por %p190, %p191
      %p193 = scmp.ne.s32.totalorder %s185, %s187
      %p194 = scmp.eq.s32.totalorder %s30, 1
      %p195 = por %p193, %p194
      %p196 = scmp.ne.s32.totalorder %s187, %s188
      %p197 = scmp.eq.s32.totalorder %s30, 0
      %p198 = por %p196, %p197
      %p199 = scmp.ne.s32.totalorder %s187, %s188
      %p200 = scmp.eq.s32.totalorder %s31, 1
      %p201 = por %p199, %p200
      %p203 = scmp.ne.s32.totalorder %s188, %s202
      %p204 = scmp.eq.s32.totalorder %s31, 0
      %p205 = por %p203, %p204
      %s207 = sadd.s32 %s206, 1
      %p210 = scmp.eq.s32.totalorder %s25, 1
      %p211 = scmp.ne.s32.totalorder %s206, %s208
      %p212 = scmp.eq.s32.totalorder %s25, 0
      %p213 = por %p211, %p212
      %p214 = scmp.ne.s32.totalorder %s206, %s208
      %p215 = scmp.eq.s32.totalorder %s30, 1
      %p216 = por %p214, %p215
      %p217 = scmp.ne.s32.totalorder %s208, %s209
      %p218 = scmp.eq.s32.totalorder %s30, 0
      %p219 = por %p217, %p218
      %p220 = scmp.ne.s32.totalorder %s208, %s209
      %p221 = scmp.eq.s32.totalorder %s31, 1
      %p222 = por %p220, %p221
      %p224 = scmp.ne.s32.totalorder %s209, %s223
      %p225 = scmp.eq.s32.totalorder %s31, 0
      %p226 = por %p224, %p225
      %s228 = sadd.s32 %s227, 1
      %p231 = scmp.eq.s32.totalorder %s25, 1
      %p232 = scmp.ne.s32.totalorder %s227, %s229
      %p233 = scmp.eq.s32.totalorder %s25, 0
      %p234 = por %p232, %p233
      %p235 = scmp.ne.s32.totalorder %s227, %s229
      %p236 = scmp.eq.s32.totalorder %s30, 1
      %p237 = por %p235, %p236
      %p238 = scmp.ne.s32.totalorder %s229, %s230
      %p239 = scmp.eq.s32.totalorder %s30, 0
      %p240 = por %p238, %p239
      %p241 = scmp.ne.s32.totalorder %s229, %s230
      %p242 = scmp.eq.s32.totalorder %s31, 1
      %p243 = por %p241, %p242
      %p245 = scmp.ne.s32.totalorder %s230, %s244
      %p246 = scmp.eq.s32.totalorder %s31, 0
      %p247 = por %p245, %p246
      %s249 = sadd.s32 %s248, 1
      %p252 = scmp.eq.s32.totalorder %s25, 1
      %p253 = scmp.ne.s32.totalorder %s248, %s250
      %p254 = scmp.eq.s32.totalorder %s25, 0
      %p255 = por %p253, %p254
      %p256 = scmp.ne.s32.totalorder %s248, %s250
      %p257 = scmp.eq.s32.totalorder %s30, 1
      %p258 = por %p256, %p257
      %p259 = scmp.ne.s32.totalorder %s250, %s251
      %p260 = scmp.eq.s32.totalorder %s30, 0
      %p261 = por %p259, %p260
      %p262 = scmp.ne.s32.totalorder %s250, %s251
      %p263 = scmp.eq.s32.totalorder %s31, 1
      %p264 = por %p262, %p263
      %p266 = scmp.ne.s32.totalorder %s251, %s265
      %p267 = scmp.eq.s32.totalorder %s31, 0
      %p268 = por %p266, %p267
      %s270 = sadd.s32 %s269, 1
      %p273 = scmp.eq.s32.totalorder %s25, 1
      %p274 = scmp.ne.s32.totalorder %s269, %s271
      %p275 = scmp.eq.s32.totalorder %s25, 0
      %p276 = por %p274, %p275
      %p277 = scmp.ne.s32.totalorder %s269, %s271
      %p278 = scmp.eq.s32.totalorder %s30, 1
      %p279 = por %p277, %p278
      %p280 = scmp.ne.s32.totalorder %s271, %s272
      %p281 = scmp.eq.s32.totalorder %s30, 0
      %p282 = por %p280, %p281
      %p283 = scmp.ne.s32.totalorder %s271, %s272
      %p284 = scmp.eq.s32.totalorder %s31, 1
      %p285 = por %p283, %p284
      %p287 = scmp.ne.s32.totalorder %s272, %s286
      %p288 = scmp.eq.s32.totalorder %s31, 0
      %p289 = por %p287, %p288
      %s290 = ssub.s32 %s25, %s32
      %p291 = scmp.eq.s32.totalorder %s290, 0
      %s293 = sadd.s32 %s292, 1
      %s294 = scalar_select %p291, %s292, %s293
      %p297 = pneg %p291
      %p298 = scmp.eq.s32.totalorder %s25, 1
      %p299 = por %p297, %p298
      %p300 = scmp.ne.s32.totalorder %s292, %s295
      %p301 = scmp.eq.s32.totalorder %s25, 0
      %p302 = por %p300, %p301
      %p303 = scmp.ne.s32.totalorder %s292, %s295
      %p304 = scmp.eq.s32.totalorder %s30, 1
      %p305 = por %p303, %p304
      %p306 = scmp.ne.s32.totalorder %s295, %s296
      %p307 = scmp.eq.s32.totalorder %s30, 0
      %p308 = por %p306, %p307
      %p309 = scmp.ne.s32.totalorder %s295, %s296
      %p310 = scmp.eq.s32.totalorder %s31, 1
      %p311 = por %p309, %p310
      %p313 = scmp.ne.s32.totalorder %s296, %s312
      %p314 = scmp.eq.s32.totalorder %s31, 0
      %p315 = por %p313, %p314
      %p316 = scmp.le.s32.totalorder 1, %s25
      %p317 = scmp.lt.s32.totalorder %s25, 3
      %p318 = pnand %p316, %p317
      %p319 = pneg %p318
      // Predicated region
      $region9: #{tpu_custom_call.1} parent=5 // pred_check
        _
      $region10: #{tpu_custom_call.1} parent=5 // pred_check_branch
        %321 = sbr.rel (%p318) target = $region12
      $region11: #{tpu_custom_call.1} parent=5 // pred_region
        %s322 = ssub.s32 %s25, 1
        // Predicated region
        $region13: #{tpu_custom_call.1} parent=11 // pred_check
          %p323 = pneg %p72
        $region14: #{tpu_custom_call.1} parent=11 // pred_check_branch
          %325 = sbr.rel (%p323) target = $region16
        $region15: #{tpu_custom_call.1} parent=11 // pred_region
          _
        $region16: #{tpu_custom_call.1} parent=11 // pred_fallthru
          _
        // Predicated region
        $region17: #{tpu_custom_call.1} parent=11 // pred_check
          %p326 = pneg %p93
        $region18: #{tpu_custom_call.1} parent=11 // pred_check_branch
          %328 = sbr.rel (%p326) target = $region20
        $region19: #{tpu_custom_call.1} parent=11 // pred_region
          _
        $region20: #{tpu_custom_call.1} parent=11 // pred_fallthru
          _
        // Predicated region
        $region21: #{tpu_custom_call.1} parent=11 // pred_check
          %p329 = pneg %p114
        $region22: #{tpu_custom_call.1} parent=11 // pred_check_branch
          %331 = sbr.rel (%p329) target = $region24
        $region23: #{tpu_custom_call.1} parent=11 // pred_region
          %s333 = ssub.s32 1024, 1024
          %334 = vsyncadd [#allocation3], %s333
          %s335 = sshll.u32 [#allocation2], 4
          %s336 = int_to_ptr.vmem [resolvable:$true] %s335
          %341 = dma.hbm_to_vmem [thread:$0]  %s3, 1024, %s336, [#allocation3], 64, 64, 4
        $region24: #{tpu_custom_call.1} parent=11 // pred_fallthru
          _
        // Predicated region
        $region25: #{tpu_custom_call.1} parent=11 // pred_check
          %p342 = pneg %p135
        $region26: #{tpu_custom_call.1} parent=11 // pred_check_branch
          %344 = sbr.rel (%p342) target = $region28
        $region27: #{tpu_custom_call.1} parent=11 // pred_region
          _
        $region28: #{tpu_custom_call.1} parent=11 // pred_fallthru
          _
        // Predicated region
        $region29: #{tpu_custom_call.1} parent=11 // pred_check
          %p345 = pneg %p156
        $region30: #{tpu_custom_call.1} parent=11 // pred_check_branch
          %347 = sbr.rel (%p345) target = $region32
        $region31: #{tpu_custom_call.1} parent=11 // pred_region
          %s349 = ssub.s32 1024, 1024
          %350 = vsyncadd [#allocation6], %s349
          %s351 = sshll.u32 [#allocation5], 4
          %s352 = int_to_ptr.vmem [resolvable:$true] %s351
          %357 = dma.hbm_to_vmem [thread:$0]  %s5, 1024, %s352, [#allocation6], 64, 64, 4
        $region32: #{tpu_custom_call.1} parent=11 // pred_fallthru
          _
        // Predicated region
        $region33: #{tpu_custom_call.1} parent=11 // pred_check
          %p358 = pneg %p177
        $region34: #{tpu_custom_call.1} parent=11 // pred_check_branch
          %360 = sbr.rel (%p358) target = $region36
        $region35: #{tpu_custom_call.1} parent=11 // pred_region
          %s362 = ssub.s32 1024, 1024
          %363 = vsyncadd [#allocation6], %s362
          %s364 = sshll.u32 [#allocation7], 4
          %s365 = int_to_ptr.vmem [resolvable:$true] %s364
          %370 = dma.hbm_to_vmem [thread:$0]  %s6, 1024, %s365, [#allocation6], 64, 64, 4
        $region36: #{tpu_custom_call.1} parent=11 // pred_fallthru
          _
        // Predicated region
        $region37: #{tpu_custom_call.1} parent=11 // pred_check
          %p371 = pneg %p198
        $region38: #{tpu_custom_call.1} parent=11 // pred_check_branch
          %373 = sbr.rel (%p371) target = $region40
        $region39: #{tpu_custom_call.1} parent=11 // pred_region
          _
        $region40: #{tpu_custom_call.1} parent=11 // pred_fallthru
          _
        // Predicated region
        $region41: #{tpu_custom_call.1} parent=11 // pred_check
          %p374 = pneg %p219
        $region42: #{tpu_custom_call.1} parent=11 // pred_check_branch
          %376 = sbr.rel (%p374) target = $region44
        $region43: #{tpu_custom_call.1} parent=11 // pred_region
          %s378 = ssub.s32 1024, 1024
          %379 = vsyncadd [#allocation9], %s378
          %s380 = sshll.u32 [#allocation8], 4
          %s381 = int_to_ptr.vmem [resolvable:$true] %s380
          %386 = dma.hbm_to_vmem [thread:$0]  %s8, 1024, %s381, [#allocation9], 64, 64, 4
        $region44: #{tpu_custom_call.1} parent=11 // pred_fallthru
          _
        // Predicated region
        $region45: #{tpu_custom_call.1} parent=11 // pred_check
          %p387 = pneg %p240
        $region46: #{tpu_custom_call.1} parent=11 // pred_check_branch
          %389 = sbr.rel (%p387) target = $region48
        $region47: #{tpu_custom_call.1} parent=11 // pred_region
          %s391 = ssub.s32 1024, 1024
          %392 = vsyncadd [#allocation9], %s391
          %s393 = sshll.u32 [#allocation10], 4
          %s394 = int_to_ptr.vmem [resolvable:$true] %s393
          %399 = dma.hbm_to_vmem [thread:$0]  %s9, 1024, %s394, [#allocation9], 64, 64, 4
        $region48: #{tpu_custom_call.1} parent=11 // pred_fallthru
          _
        // Predicated region
        $region49: #{tpu_custom_call.1} parent=11 // pred_check
          %p400 = pneg %p261
        $region50: #{tpu_custom_call.1} parent=11 // pred_check_branch
          %402 = sbr.rel (%p400) target = $region52
        $region51: #{tpu_custom_call.1} parent=11 // pred_region
          %s404 = ssub.s32 1024, 1024
          %405 = vsyncadd [#allocation12], %s404
          %s406 = sshll.u32 [#allocation11], 4
          %s407 = int_to_ptr.vmem [resolvable:$true] %s406
          %412 = dma.hbm_to_vmem [thread:$0]  %s10, 1024, %s407, [#allocation12], 64, 64, 4
        $region52: #{tpu_custom_call.1} parent=11 // pred_fallthru
          _
        // Predicated region
        $region53: #{tpu_custom_call.1} parent=11 // pred_check
          %p413 = pneg %p282
        $region54: #{tpu_custom_call.1} parent=11 // pred_check_branch
          %415 = sbr.rel (%p413) target = $region56
        $region55: #{tpu_custom_call.1} parent=11 // pred_region
          _
        $region56: #{tpu_custom_call.1} parent=11 // pred_fallthru
          _
      $region12: #{tpu_custom_call.1} parent=5 // pred_fallthru
        _
      %p416 = scmp.lt.s32.totalorder %s25, 2
      // Predicated region
      $region57: #{tpu_custom_call.1} parent=5 // pred_check
        %p417 = pneg %p416
      $region58: #{tpu_custom_call.1} parent=5 // pred_check_branch
        %419 = sbr.rel (%p417) target = $region60
      $region59: #{tpu_custom_call.1} parent=5 // pred_region
        // Predicated region
        $region61: #{tpu_custom_call.1} parent=59 // pred_check
          %p420 = pneg %p45
        $region62: #{tpu_custom_call.1} parent=59 // pred_check_branch
          %422 = sbr.rel (%p420) target = $region64
        $region63: #{tpu_custom_call.1} parent=59 // pred_region
          %s423 = smul.u32 2, %s25
          %p424 = scmp.lt.s32.totalorder %s423, 3
          %s425 = scalar_select %p424, %s423, 3
          %s426 = smul.addr %s425, 4
          %s427 = scalar_lea.vmem %s0, %s426
          %s428 = smul.u32 2, %s25
        $region64: #{tpu_custom_call.1} parent=59 // pred_fallthru
          _
      $region60: #{tpu_custom_call.1} parent=5 // pred_fallthru
        _
      %p429 = scmp.le.s32.totalorder 1, %s25
      %p430 = scmp.lt.s32.totalorder %s25, 3
      %p431 = pnand %p429, %p430
      %p432 = pneg %p431
      // Predicated region
      $region65: #{tpu_custom_call.1} parent=5 // pred_check
        _
      $region66: #{tpu_custom_call.1} parent=5 // pred_check_branch
        %434 = sbr.rel (%p431) target = $region68
      $region67: #{tpu_custom_call.1} parent=5 // pred_region
        %s435 = ssub.s32 %s25, 1
        // Predicated region
        $region69: #{tpu_custom_call.1} parent=67 // pred_check
          %p436 = pneg %p114
        $region70: #{tpu_custom_call.1} parent=67 // pred_check_branch
          %438 = sbr.rel (%p436) target = $region72
        $region71: #{tpu_custom_call.1} parent=67 // pred_region
          %439 = dma.done [#allocation3], 1024
        $region72: #{tpu_custom_call.1} parent=67 // pred_fallthru
          _
        // Predicated region
        $region73: #{tpu_custom_call.1} parent=67 // pred_check
          %p440 = pneg %p156
        $region74: #{tpu_custom_call.1} parent=67 // pred_check_branch
          %442 = sbr.rel (%p440) target = $region76
        $region75: #{tpu_custom_call.1} parent=67 // pred_region
          %443 = dma.done [#allocation6], 1024
        $region76: #{tpu_custom_call.1} parent=67 // pred_fallthru
          _
        // Predicated region
        $region77: #{tpu_custom_call.1} parent=67 // pred_check
          %p444 = pneg %p177
        $region78: #{tpu_custom_call.1} parent=67 // pred_check_branch
          %446 = sbr.rel (%p444) target = $region80
        $region79: #{tpu_custom_call.1} parent=67 // pred_region
          %447 = dma.done [#allocation6], 1024
        $region80: #{tpu_custom_call.1} parent=67 // pred_fallthru
          _
        // Predicated region
        $region81: #{tpu_custom_call.1} parent=67 // pred_check
          %p448 = pneg %p219
        $region82: #{tpu_custom_call.1} parent=67 // pred_check_branch
          %450 = sbr.rel (%p448) target = $region84
        $region83: #{tpu_custom_call.1} parent=67 // pred_region
          %451 = dma.done [#allocation9], 1024
        $region84: #{tpu_custom_call.1} parent=67 // pred_fallthru
          _
        // Predicated region
        $region85: #{tpu_custom_call.1} parent=67 // pred_check
          %p452 = pneg %p240
        $region86: #{tpu_custom_call.1} parent=67 // pred_check_branch
          %454 = sbr.rel (%p452) target = $region88
        $region87: #{tpu_custom_call.1} parent=67 // pred_region
          %455 = dma.done [#allocation9], 1024
        $region88: #{tpu_custom_call.1} parent=67 // pred_fallthru
          _
        // Predicated region
        $region89: #{tpu_custom_call.1} parent=67 // pred_check
          %p456 = pneg %p261
        $region90: #{tpu_custom_call.1} parent=67 // pred_check_branch
          %458 = sbr.rel (%p456) target = $region92
        $region91: #{tpu_custom_call.1} parent=67 // pred_region
          %459 = dma.done [#allocation12], 1024
        $region92: #{tpu_custom_call.1} parent=67 // pred_fallthru
          _
        %s460 = smul.u32 2, %s30
        %p461 = scmp.lt.s32.totalorder %s460, 3
        %s462 = scalar_select %p461, %s460, 3
        %s463 = smul.addr %s462, 4
        %s464 = scalar_lea.vmem %s0, %s463
        %p465 = pneg %p51
        %p466 = pneg %p48
        %p467 = pneg %p72
        %p468 = pneg %p69
        %p469 = pneg %p93
        %p470 = pneg %p90
        %p471 = pneg %p114
        %p472 = pneg %p111
        %p473 = pneg %p135
        %p474 = pneg %p132
        %p475 = pneg %p156
        %p476 = pneg %p153
        %p477 = pneg %p177
        %p478 = pneg %p174
        %p479 = pneg %p198
        %p480 = pneg %p195
        %p481 = pneg %p219
        %p482 = pneg %p216
        %p483 = pneg %p240
        %p484 = pneg %p237
        %p485 = pneg %p261
        %p486 = pneg %p258
        %p487 = pneg %p282
        %p488 = pneg %p279
        %p489 = pneg %p308
        %p490 = pneg %p305
        %s491 = sand.u32 %s295, 1
        %s492 = scalar_lea.sflag [#allocation4], %s491
        %s493 = sand.u32 %s295, 1
        %s494 = smul.addr %s493, 16
        %s495 = scalar_lea.vmem [#allocation13], %s494
        %s496 = smul.u32 2, %s30
        %p497 = scmp.lt.s32.totalorder %s496, 3
        %s498 = scalar_select %p497, %s496, 3
        %s499 = smul.addr %s498, 4
        %s500 = scalar_lea.vmem %s0, %s499
        %s501 = smul.u32 2, %s30
        %s502 = smul.u32 2, %s30
        %v504 = vld [vmem:[%s500] sm:$0xf]
        %v505 = vld [vmem:[%s500 + $0x4] sm:$0xf]
        %v506 = vld [vmem:[%s1] sm:$0xf]
        %v507 = vld [vmem:[%s1 + $0x4] sm:$0xf]
        %v508 = vld [vmem:[%s1 + $0x8] sm:$0xf]
        %v509 = vld [vmem:[%s2] sm:$0x1]
        %v511 = vlaneseq
        %v512 = vshrl.u32 %v511, 7
        %v513 = vsub.s32 0, %v512
        %v514 = vrot.slane %v509, %v513
        %v518 = vunpack.c.l.b16 %v504
        %v519 = vunpack.c.l.b16 %v505
        %v520 = vpack.c.b16 %v519, %v518
        %v524 = vunpack.c.l.b16 %v506
        %v525 = vunpack.c.l.b16 %v507
        %v526 = vunpack.c.l.b16 %v508
        %v527 = vpack.c.b16 %v525, %v524
        %v528 = vpack.c.b16 %v526, %v526
        %vm530 = vcmask 195584
        %v532 = vsel %vm530, %v520, 0
        %vm534 = vcmask 1043456
        %v536 = vsel %vm534, %v528, 0
        %538 = vmatprep.subr.bf16.mxu0 0
        %539 = vmatpush1.bf16.msra.mxu0 0
        %540 = vmatprep.subr.bf16.mxu0 0
        %541 = vmatpush1.bf16.msra.mxu0 0
        %542 = vmatprep.subr.bf16.mxu0 0
        %543 = vmatpush1.bf16.msra.mxu0 0
        %544 = vmatprep.subr.bf16.mxu0 0
        %545 = vmatpush1.bf16.msra.mxu0 0
        %546 = vmatprep.subr.bf16.mxu0 0
        %547 = vmatpush1.bf16.msra.mxu0 0
        %548 = vmatprep.subr.bf16.mxu0 0
        %549 = vmatpush1.bf16.msra.mxu0 0
        %550 = vmatprep.subr.bf16.mxu0 0
        %551 = vmatpush1.bf16.msra.mxu0 %v536
        %552 = vmatprep.subr.bf16.mxu0 0
        %553 = vmatpush1.bf16.msra.mxu0 %v527
        %554 = vmatprep.subr.bf16.mxu0 0
        %555 = vmatpush2.bf16.msra.mxu0 0
        %556 = vmatprep.subr.bf16.mxu0 0
        %557 = vmatpush2.bf16.msra.mxu0 0
        %558 = vmatprep.subr.bf16.mxu0 0
        %559 = vmatpush2.bf16.msra.mxu0 0
        %560 = vmatprep.subr.bf16.mxu0 0
        %561 = vmatpush2.bf16.msra.mxu0 0
        %562 = vmatprep.subr.bf16.mxu0 0
        %563 = vmatpush2.bf16.msra.mxu0 0
        %564 = vmatprep.subr.bf16.mxu0 0
        %565 = vmatpush2.bf16.msra.mxu0 0
        %566 = vmatprep.subr.bf16.mxu0 0
        %567 = vmatpush2.bf16.msra.mxu0 0
        %568 = vmatprep.subr.bf16.mxu0 0
        %569 = vmatpush2.bf16.msra.mxu0 0
        %570 = vmatprep.mubr.bf16.mxu0 0
        %571 = vmatmul.mubr.bf16.gmra.mxu0 %v532
        %v572 = vpop.f32.mrf.mxu0
        %v573 = vadd.f32 %v514, %v572
        %v574 = vpop.f32.mrf.mxu0
        %v575 = vpop.f32.mrf.mxu0
        %v576 = vadd.f32 %v514, %v575
        %v577 = vpop.f32.mrf.mxu0
        %578 = vdwg.mxu0
        %v579 = vmax.f32 %v573, 0.0
        %v580 = vmax.f32 %v576, 0.0
        %v581 = vpack.c.bf16 %v580, %v579
        %v582 = vld [vmem:[#allocation2] sm:$0xf]
        %v583 = vld [vmem:[#allocation2 + $0x4] sm:$0xf]
        %v584 = vld [vmem:[#allocation2 + $0x8] sm:$0xf]
        %v585 = vld [vmem:[#allocation2 + $0xc] sm:$0xf]
        %v586 = vld [vmem:[#allocation2 + $0x10] sm:$0xf]
        %v587 = vld [vmem:[#allocation2 + $0x14] sm:$0xf]
        %v588 = vld [vmem:[#allocation2 + $0x18] sm:$0xf]
        %v589 = vld [vmem:[#allocation2 + $0x1c] sm:$0xf]
        %v590 = vld [vmem:[#allocation2 + $0x20] sm:$0xf]
        %v591 = vld [vmem:[#allocation2 + $0x24] sm:$0xf]
        %v592 = vld [vmem:[#allocation2 + $0x28] sm:$0xf]
        %v593 = vld [vmem:[#allocation2 + $0x2c] sm:$0xf]
        %v594 = vld [vmem:[#allocation2 + $0x30] sm:$0xf]
        %v595 = vld [vmem:[#allocation2 + $0x34] sm:$0xf]
        %v596 = vld [vmem:[#allocation2 + $0x38] sm:$0xf]
        %v597 = vld [vmem:[#allocation2 + $0x3c] sm:$0xf]
        %v598 = vld [vmem:[%s4] sm:$0x1]
        %v600 = vlaneseq
        %v601 = vshrl.u32 %v600, 7
        %v602 = vsub.s32 0, %v601
        %v603 = vrot.slane %v598, %v602
        %v621 = vunpack.c.l.b16 %v582
        %v622 = vunpack.c.l.b16 %v583
        %v623 = vunpack.c.l.b16 %v584
        %v624 = vunpack.c.l.b16 %v585
        %v625 = vunpack.c.l.b16 %v586
        %v626 = vunpack.c.l.b16 %v587
        %v627 = vunpack.c.l.b16 %v588
        %v628 = vunpack.c.l.b16 %v589
        %v629 = vunpack.c.l.b16 %v590
        %v630 = vunpack.c.l.b16 %v591
        %v631 = vunpack.c.l.b16 %v592
        %v632 = vunpack.c.l.b16 %v593
        %v633 = vunpack.c.l.b16 %v594
        %v634 = vunpack.c.l.b16 %v595
        %v635 = vunpack.c.l.b16 %v596
        %v636 = vunpack.c.l.b16 %v597
        %v637 = vpack.c.b16 %v622, %v621
        %v638 = vpack.c.b16 %v624, %v623
        %v639 = vpack.c.b16 %v626, %v625
        %v640 = vpack.c.b16 %v628, %v627
        %v641 = vpack.c.b16 %v630, %v629
        %v642 = vpack.c.b16 %v632, %v631
        %v643 = vpack.c.b16 %v634, %v633
        %v644 = vpack.c.b16 %v636, %v635
        %653 = vmatprep.subr.bf16.mxu0 0
        %654 = vmatpush1.bf16.msra.mxu0 %v644
        %655 = vmatprep.subr.bf16.mxu0 0
        %656 = vmatpush1.bf16.msra.mxu0 %v643
        %657 = vmatprep.subr.bf16.mxu0 0
        %658 = vmatpush1.bf16.msra.mxu0 %v642
        %659 = vmatprep.subr.bf16.mxu0 0
        %660 = vmatpush1.bf16.msra.mxu0 %v641
        %661 = vmatprep.subr.bf16.mxu0 0
        %662 = vmatpush1.bf16.msra.mxu0 %v640
        %663 = vmatprep.subr.bf16.mxu0 0
        %664 = vmatpush1.bf16.msra.mxu0 %v639
        %665 = vmatprep.subr.bf16.mxu0 0
        %666 = vmatpush1.bf16.msra.mxu0 %v638
        %667 = vmatprep.subr.bf16.mxu0 0
        %668 = vmatpush1.bf16.msra.mxu0 %v637
        %669 = vmatprep.subr.bf16.mxu0 0
        %670 = vmatpush2.bf16.msra.mxu0 0
        %671 = vmatprep.subr.bf16.mxu0 0
        %672 = vmatpush2.bf16.msra.mxu0 0
        %673 = vmatprep.subr.bf16.mxu0 0
        %674 = vmatpush2.bf16.msra.mxu0 0
        %675 = vmatprep.subr.bf16.mxu0 0
        %676 = vmatpush2.bf16.msra.mxu0 0
        %677 = vmatprep.subr.bf16.mxu0 0
        %678 = vmatpush2.bf16.msra.mxu0 0
        %679 = vmatprep.subr.bf16.mxu0 0
        %680 = vmatpush2.bf16.msra.mxu0 0
        %681 = vmatprep.subr.bf16.mxu0 0
        %682 = vmatpush2.bf16.msra.mxu0 0
        %683 = vmatprep.subr.bf16.mxu0 0
        %684 = vmatpush2.bf16.msra.mxu0 0
        %685 = vmatprep.mubr.bf16.mxu0 0
        %686 = vmatmul.mubr.bf16.gmra.mxu0 %v581
        %v687 = vpop.f32.mrf.mxu0
        %v688 = vadd.f32 %v603, %v687
        %v689 = vpop.f32.mrf.mxu0
        %v690 = vpop.f32.mrf.mxu0
        %v691 = vadd.f32 %v603, %v690
        %v692 = vpop.f32.mrf.mxu0
        %693 = vdwg.mxu0
        %v694 = vadd.f32 %v688, 3.0
        %v695 = vadd.f32 %v691, 3.0
        %v696 = vmax.f32 %v694, 0.0
        %v697 = vmax.f32 %v695, 0.0
        %v698 = vmin.f32 %v696, 6.0
        %v699 = vmin.f32 %v697, 6.0
        %v700 = vmul.f32 %v698, 0.16666667
        %v701 = vmul.f32 %v699, 0.16666667
        %v702 = vmul.f32 %v700, %v688
        %v703 = vmul.f32 %v701, %v691
        %v704 = vpack.c.bf16 %v703, %v702
        %v705 = vld [vmem:[#allocation5] sm:$0xf]
        %v706 = vld [vmem:[#allocation5 + $0x4] sm:$0xf]
        %v707 = vld [vmem:[#allocation5 + $0x8] sm:$0xf]
        %v708 = vld [vmem:[#allocation5 + $0xc] sm:$0xf]
        %v709 = vld [vmem:[#allocation5 + $0x10] sm:$0xf]
        %v710 = vld [vmem:[#allocation5 + $0x14] sm:$0xf]
        %v711 = vld [vmem:[#allocation5 + $0x18] sm:$0xf]
        %v712 = vld [vmem:[#allocation5 + $0x1c] sm:$0xf]
        %v713 = vld [vmem:[#allocation5 + $0x20] sm:$0xf]
        %v714 = vld [vmem:[#allocation5 + $0x24] sm:$0xf]
        %v715 = vld [vmem:[#allocation5 + $0x28] sm:$0xf]
        %v716 = vld [vmem:[#allocation5 + $0x2c] sm:$0xf]
        %v717 = vld [vmem:[#allocation5 + $0x30] sm:$0xf]
        %v718 = vld [vmem:[#allocation5 + $0x34] sm:$0xf]
        %v719 = vld [vmem:[#allocation5 + $0x38] sm:$0xf]
        %v720 = vld [vmem:[#allocation5 + $0x3c] sm:$0xf]
        %v721 = vld [vmem:[#allocation7] sm:$0xf]
        %v722 = vld [vmem:[#allocation7 + $0x4] sm:$0xf]
        %v723 = vld [vmem:[#allocation7 + $0x8] sm:$0xf]
        %v724 = vld [vmem:[#allocation7 + $0xc] sm:$0xf]
        %v725 = vld [vmem:[#allocation7 + $0x10] sm:$0xf]
        %v726 = vld [vmem:[#allocation7 + $0x14] sm:$0xf]
        %v727 = vld [vmem:[#allocation7 + $0x18] sm:$0xf]
        %v728 = vld [vmem:[#allocation7 + $0x1c] sm:$0xf]
        %v729 = vld [vmem:[#allocation7 + $0x20] sm:$0xf]
        %v730 = vld [vmem:[#allocation7 + $0x24] sm:$0xf]
        %v731 = vld [vmem:[#allocation7 + $0x28] sm:$0xf]
        %v732 = vld [vmem:[#allocation7 + $0x2c] sm:$0xf]
        %v733 = vld [vmem:[#allocation7 + $0x30] sm:$0xf]
        %v734 = vld [vmem:[#allocation7 + $0x34] sm:$0xf]
        %v735 = vld [vmem:[#allocation7 + $0x38] sm:$0xf]
        %v736 = vld [vmem:[#allocation7 + $0x3c] sm:$0xf]
        %v753 = vunpack.c.l.b16 %v721
        %v754 = vunpack.c.l.b16 %v722
        %v755 = vunpack.c.l.b16 %v723
        %v756 = vunpack.c.l.b16 %v724
        %v757 = vunpack.c.l.b16 %v725
        %v758 = vunpack.c.l.b16 %v726
        %v759 = vunpack.c.l.b16 %v727
        %v760 = vunpack.c.l.b16 %v728
        %v761 = vunpack.c.l.b16 %v729
        %v762 = vunpack.c.l.b16 %v730
        %v763 = vunpack.c.l.b16 %v731
        %v764 = vunpack.c.l.b16 %v732
        %v765 = vunpack.c.l.b16 %v733
        %v766 = vunpack.c.l.b16 %v734
        %v767 = vunpack.c.l.b16 %v735
        %v768 = vunpack.c.l.b16 %v736
        %v769 = vpack.c.b16 %v754, %v753
        %v770 = vpack.c.b16 %v756, %v755
        %v771 = vpack.c.b16 %v758, %v757
        %v772 = vpack.c.b16 %v760, %v759
        %v773 = vpack.c.b16 %v762, %v761
        %v774 = vpack.c.b16 %v764, %v763
        %v775 = vpack.c.b16 %v766, %v765
        %v776 = vpack.c.b16 %v768, %v767
        %785 = vmatprep.subr.bf16.mxu0 0
        %786 = vmatpush1.bf16.msra.mxu0 %v776
        %787 = vmatprep.subr.bf16.mxu0 0
        %788 = vmatpush1.bf16.msra.mxu0 %v775
        %789 = vmatprep.subr.bf16.mxu0 0
        %790 = vmatpush1.bf16.msra.mxu0 %v774
        %791 = vmatprep.subr.bf16.mxu0 0
        %792 = vmatpush1.bf16.msra.mxu0 %v773
        %793 = vmatprep.subr.bf16.mxu0 0
        %794 = vmatpush1.bf16.msra.mxu0 %v772
        %795 = vmatprep.subr.bf16.mxu0 0
        %796 = vmatpush1.bf16.msra.mxu0 %v771
        %797 = vmatprep.subr.bf16.mxu0 0
        %798 = vmatpush1.bf16.msra.mxu0 %v770
        %799 = vmatprep.subr.bf16.mxu0 0
        %800 = vmatpush1.bf16.msra.mxu0 %v769
        %801 = vmatprep.subr.bf16.mxu0 0
        %802 = vmatpush2.bf16.msra.mxu0 0
        %803 = vmatprep.subr.bf16.mxu0 0
        %804 = vmatpush2.bf16.msra.mxu0 0
        %805 = vmatprep.subr.bf16.mxu0 0
        %806 = vmatpush2.bf16.msra.mxu0 0
        %807 = vmatprep.subr.bf16.mxu0 0
        %808 = vmatpush2.bf16.msra.mxu0 0
        %809 = vmatprep.subr.bf16.mxu0 0
        %810 = vmatpush2.bf16.msra.mxu0 0
        %811 = vmatprep.subr.bf16.mxu0 0
        %812 = vmatpush2.bf16.msra.mxu0 0
        %813 = vmatprep.subr.bf16.mxu0 0
        %814 = vmatpush2.bf16.msra.mxu0 0
        %815 = vmatprep.subr.bf16.mxu0 0
        %816 = vmatpush2.bf16.msra.mxu0 0
        %817 = vmatprep.mubr.bf16.mxu0 0
        %818 = vmatmul.mubr.bf16.gmra.mxu0 %v704
        %v819 = vpop.f32.mrf.mxu0
        %v820 = vadd.f32 0.0, %v819
        %v821 = vpop.f32.mrf.mxu0
        %v822 = vpop.f32.mrf.mxu0
        %v823 = vadd.f32 0.0, %v822
        %v824 = vpop.f32.mrf.mxu0
        %825 = vdwg.mxu0
        %v842 = vunpack.c.l.b16 %v705
        %v843 = vunpack.c.l.b16 %v706
        %v844 = vunpack.c.l.b16 %v707
        %v845 = vunpack.c.l.b16 %v708
        %v846 = vunpack.c.l.b16 %v709
        %v847 = vunpack.c.l.b16 %v710
        %v848 = vunpack.c.l.b16 %v711
        %v849 = vunpack.c.l.b16 %v712
        %v850 = vunpack.c.l.b16 %v713
        %v851 = vunpack.c.l.b16 %v714
        %v852 = vunpack.c.l.b16 %v715
        %v853 = vunpack.c.l.b16 %v716
        %v854 = vunpack.c.l.b16 %v717
        %v855 = vunpack.c.l.b16 %v718
        %v856 = vunpack.c.l.b16 %v719
        %v857 = vunpack.c.l.b16 %v720
        %v858 = vpack.c.b16 %v843, %v842
        %v859 = vpack.c.b16 %v845, %v844
        %v860 = vpack.c.b16 %v847, %v846
        %v861 = vpack.c.b16 %v849, %v848
        %v862 = vpack.c.b16 %v851, %v850
        %v863 = vpack.c.b16 %v853, %v852
        %v864 = vpack.c.b16 %v855, %v854
        %v865 = vpack.c.b16 %v857, %v856
        %874 = vmatprep.subr.bf16.mxu0 0
        %875 = vmatpush1.bf16.msra.mxu0 %v865
        %876 = vmatprep.subr.bf16.mxu0 0
        %877 = vmatpush1.bf16.msra.mxu0 %v864
        %878 = vmatprep.subr.bf16.mxu0 0
        %879 = vmatpush1.bf16.msra.mxu0 %v863
        %880 = vmatprep.subr.bf16.mxu0 0
        %881 = vmatpush1.bf16.msra.mxu0 %v862
        %882 = vmatprep.subr.bf16.mxu0 0
        %883 = vmatpush1.bf16.msra.mxu0 %v861
        %884 = vmatprep.subr.bf16.mxu0 0
        %885 = vmatpush1.bf16.msra.mxu0 %v860
        %886 = vmatprep.subr.bf16.mxu0 0
        %887 = vmatpush1.bf16.msra.mxu0 %v859
        %888 = vmatprep.subr.bf16.mxu0 0
        %889 = vmatpush1.bf16.msra.mxu0 %v858
        %890 = vmatprep.subr.bf16.mxu0 0
        %891 = vmatpush2.bf16.msra.mxu0 0
        %892 = vmatprep.subr.bf16.mxu0 0
        %893 = vmatpush2.bf16.msra.mxu0 0
        %894 = vmatprep.subr.bf16.mxu0 0
        %895 = vmatpush2.bf16.msra.mxu0 0
        %896 = vmatprep.subr.bf16.mxu0 0
        %897 = vmatpush2.bf16.msra.mxu0 0
        %898 = vmatprep.subr.bf16.mxu0 0
        %899 = vmatpush2.bf16.msra.mxu0 0
        %900 = vmatprep.subr.bf16.mxu0 0
        %901 = vmatpush2.bf16.msra.mxu0 0
        %902 = vmatprep.subr.bf16.mxu0 0
        %903 = vmatpush2.bf16.msra.mxu0 0
        %904 = vmatprep.subr.bf16.mxu0 0
        %905 = vmatpush2.bf16.msra.mxu0 0
        %906 = vmatprep.mubr.bf16.mxu0 0
        %907 = vmatmul.mubr.bf16.gmra.mxu0 %v581
        %v908 = vpop.f32.mrf.mxu0
        %v909 = vadd.f32 %v820, %v908
        %v910 = vpop.f32.mrf.mxu0
        %v911 = vpop.f32.mrf.mxu0
        %v912 = vadd.f32 %v823, %v911
        %v913 = vpop.f32.mrf.mxu0
        %914 = vdwg.mxu0
        %v915 = vld [vmem:[%s7] sm:$0x1]
        %v917 = vlaneseq
        %v918 = vshrl.u32 %v917, 7
        %v919 = vsub.s32 0, %v918
        %v920 = vrot.slane %v915, %v919
        %v922 = vadd.f32 %v909, %v920
        %v923 = vadd.f32 %v912, %v920
        %v924 = vadd.f32 %v922, 3.0
        %v925 = vadd.f32 %v923, 3.0
        %v926 = vmax.f32 %v924, 0.0
        %v927 = vmax.f32 %v925, 0.0
        %v928 = vmin.f32 %v926, 6.0
        %v929 = vmin.f32 %v927, 6.0
        %v930 = vmul.f32 %v928, 0.16666667
        %v931 = vmul.f32 %v929, 0.16666667
        %v932 = vmul.f32 %v930, %v922
        %v933 = vmul.f32 %v931, %v923
        %v934 = vpack.c.bf16 %v933, %v932
        %v935 = vld [vmem:[#allocation8] sm:$0xf]
        %v936 = vld [vmem:[#allocation8 + $0x4] sm:$0xf]
        %v937 = vld [vmem:[#allocation8 + $0x8] sm:$0xf]
        %v938 = vld [vmem:[#allocation8 + $0xc] sm:$0xf]
        %v939 = vld [vmem:[#allocation8 + $0x10] sm:$0xf]
        %v940 = vld [vmem:[#allocation8 + $0x14] sm:$0xf]
        %v941 = vld [vmem:[#allocation8 + $0x18] sm:$0xf]
        %v942 = vld [vmem:[#allocation8 + $0x1c] sm:$0xf]
        %v943 = vld [vmem:[#allocation8 + $0x20] sm:$0xf]
        %v944 = vld [vmem:[#allocation8 + $0x24] sm:$0xf]
        %v945 = vld [vmem:[#allocation8 + $0x28] sm:$0xf]
        %v946 = vld [vmem:[#allocation8 + $0x2c] sm:$0xf]
        %v947 = vld [vmem:[#allocation8 + $0x30] sm:$0xf]
        %v948 = vld [vmem:[#allocation8 + $0x34] sm:$0xf]
        %v949 = vld [vmem:[#allocation8 + $0x38] sm:$0xf]
        %v950 = vld [vmem:[#allocation8 + $0x3c] sm:$0xf]
        %v951 = vld [vmem:[#allocation10] sm:$0xf]
        %v952 = vld [vmem:[#allocation10 + $0x4] sm:$0xf]
        %v953 = vld [vmem:[#allocation10 + $0x8] sm:$0xf]
        %v954 = vld [vmem:[#allocation10 + $0xc] sm:$0xf]
        %v955 = vld [vmem:[#allocation10 + $0x10] sm:$0xf]
        %v956 = vld [vmem:[#allocation10 + $0x14] sm:$0xf]
        %v957 = vld [vmem:[#allocation10 + $0x18] sm:$0xf]
        %v958 = vld [vmem:[#allocation10 + $0x1c] sm:$0xf]
        %v959 = vld [vmem:[#allocation10 + $0x20] sm:$0xf]
        %v960 = vld [vmem:[#allocation10 + $0x24] sm:$0xf]
        %v961 = vld [vmem:[#allocation10 + $0x28] sm:$0xf]
        %v962 = vld [vmem:[#allocation10 + $0x2c] sm:$0xf]
        %v963 = vld [vmem:[#allocation10 + $0x30] sm:$0xf]
        %v964 = vld [vmem:[#allocation10 + $0x34] sm:$0xf]
        %v965 = vld [vmem:[#allocation10 + $0x38] sm:$0xf]
        %v966 = vld [vmem:[#allocation10 + $0x3c] sm:$0xf]
        %v983 = vunpack.c.l.b16 %v951
        %v984 = vunpack.c.l.b16 %v952
        %v985 = vunpack.c.l.b16 %v953
        %v986 = vunpack.c.l.b16 %v954
        %v987 = vunpack.c.l.b16 %v955
        %v988 = vunpack.c.l.b16 %v956
        %v989 = vunpack.c.l.b16 %v957
        %v990 = vunpack.c.l.b16 %v958
        %v991 = vunpack.c.l.b16 %v959
        %v992 = vunpack.c.l.b16 %v960
        %v993 = vunpack.c.l.b16 %v961
        %v994 = vunpack.c.l.b16 %v962
        %v995 = vunpack.c.l.b16 %v963
        %v996 = vunpack.c.l.b16 %v964
        %v997 = vunpack.c.l.b16 %v965
        %v998 = vunpack.c.l.b16 %v966
        %v999 = vpack.c.b16 %v984, %v983
        %v1000 = vpack.c.b16 %v986, %v985
        %v1001 = vpack.c.b16 %v988, %v987
        %v1002 = vpack.c.b16 %v990, %v989
        %v1003 = vpack.c.b16 %v992, %v991
        %v1004 = vpack.c.b16 %v994, %v993
        %v1005 = vpack.c.b16 %v996, %v995
        %v1006 = vpack.c.b16 %v998, %v997
        %1015 = vmatprep.subr.bf16.mxu0 0
        %1016 = vmatpush1.bf16.msra.mxu0 %v1006
        %1017 = vmatprep.subr.bf16.mxu0 0
        %1018 = vmatpush1.bf16.msra.mxu0 %v1005
        %1019 = vmatprep.subr.bf16.mxu0 0
        %1020 = vmatpush1.bf16.msra.mxu0 %v1004
        %1021 = vmatprep.subr.bf16.mxu0 0
        %1022 = vmatpush1.bf16.msra.mxu0 %v1003
        %1023 = vmatprep.subr.bf16.mxu0 0
        %1024 = vmatpush1.bf16.msra.mxu0 %v1002
        %1025 = vmatprep.subr.bf16.mxu0 0
        %1026 = vmatpush1.bf16.msra.mxu0 %v1001
        %1027 = vmatprep.subr.bf16.mxu0 0
        %1028 = vmatpush1.bf16.msra.mxu0 %v1000
        %1029 = vmatprep.subr.bf16.mxu0 0
        %1030 = vmatpush1.bf16.msra.mxu0 %v999
        %1031 = vmatprep.subr.bf16.mxu0 0
        %1032 = vmatpush2.bf16.msra.mxu0 0
        %1033 = vmatprep.subr.bf16.mxu0 0
        %1034 = vmatpush2.bf16.msra.mxu0 0
        %1035 = vmatprep.subr.bf16.mxu0 0
        %1036 = vmatpush2.bf16.msra.mxu0 0
        %1037 = vmatprep.subr.bf16.mxu0 0
        %1038 = vmatpush2.bf16.msra.mxu0 0
        %1039 = vmatprep.subr.bf16.mxu0 0
        %1040 = vmatpush2.bf16.msra.mxu0 0
        %1041 = vmatprep.subr.bf16.mxu0 0
        %1042 = vmatpush2.bf16.msra.mxu0 0
        %1043 = vmatprep.subr.bf16.mxu0 0
        %1044 = vmatpush2.bf16.msra.mxu0 0
        %1045 = vmatprep.subr.bf16.mxu0 0
        %1046 = vmatpush2.bf16.msra.mxu0 0
        %1047 = vmatprep.mubr.bf16.mxu0 0
        %1048 = vmatmul.mubr.bf16.gmra.mxu0 %v704
        %v1049 = vpop.f32.mrf.mxu0
        %v1050 = vadd.f32 0.0, %v1049
        %v1051 = vpop.f32.mrf.mxu0
        %v1052 = vpop.f32.mrf.mxu0
        %v1053 = vadd.f32 0.0, %v1052
        %v1054 = vpop.f32.mrf.mxu0
        %1055 = vdwg.mxu0
        %v1072 = vunpack.c.l.b16 %v935
        %v1073 = vunpack.c.l.b16 %v936
        %v1074 = vunpack.c.l.b16 %v937
        %v1075 = vunpack.c.l.b16 %v938
        %v1076 = vunpack.c.l.b16 %v939
        %v1077 = vunpack.c.l.b16 %v940
        %v1078 = vunpack.c.l.b16 %v941
        %v1079 = vunpack.c.l.b16 %v942
        %v1080 = vunpack.c.l.b16 %v943
        %v1081 = vunpack.c.l.b16 %v944
        %v1082 = vunpack.c.l.b16 %v945
        %v1083 = vunpack.c.l.b16 %v946
        %v1084 = vunpack.c.l.b16 %v947
        %v1085 = vunpack.c.l.b16 %v948
        %v1086 = vunpack.c.l.b16 %v949
        %v1087 = vunpack.c.l.b16 %v950
        %v1088 = vpack.c.b16 %v1073, %v1072
        %v1089 = vpack.c.b16 %v1075, %v1074
        %v1090 = vpack.c.b16 %v1077, %v1076
        %v1091 = vpack.c.b16 %v1079, %v1078
        %v1092 = vpack.c.b16 %v1081, %v1080
        %v1093 = vpack.c.b16 %v1083, %v1082
        %v1094 = vpack.c.b16 %v1085, %v1084
        %v1095 = vpack.c.b16 %v1087, %v1086
        %1104 = vmatprep.subr.bf16.mxu0 0
        %1105 = vmatpush1.bf16.msra.mxu0 %v1095
        %1106 = vmatprep.subr.bf16.mxu0 0
        %1107 = vmatpush1.bf16.msra.mxu0 %v1094
        %1108 = vmatprep.subr.bf16.mxu0 0
        %1109 = vmatpush1.bf16.msra.mxu0 %v1093
        %1110 = vmatprep.subr.bf16.mxu0 0
        %1111 = vmatpush1.bf16.msra.mxu0 %v1092
        %1112 = vmatprep.subr.bf16.mxu0 0
        %1113 = vmatpush1.bf16.msra.mxu0 %v1091
        %1114 = vmatprep.subr.bf16.mxu0 0
        %1115 = vmatpush1.bf16.msra.mxu0 %v1090
        %1116 = vmatprep.subr.bf16.mxu0 0
        %1117 = vmatpush1.bf16.msra.mxu0 %v1089
        %1118 = vmatprep.subr.bf16.mxu0 0
        %1119 = vmatpush1.bf16.msra.mxu0 %v1088
        %1120 = vmatprep.subr.bf16.mxu0 0
        %1121 = vmatpush2.bf16.msra.mxu0 0
        %1122 = vmatprep.subr.bf16.mxu0 0
        %1123 = vmatpush2.bf16.msra.mxu0 0
        %1124 = vmatprep.subr.bf16.mxu0 0
        %1125 = vmatpush2.bf16.msra.mxu0 0
        %1126 = vmatprep.subr.bf16.mxu0 0
        %1127 = vmatpush2.bf16.msra.mxu0 0
        %1128 = vmatprep.subr.bf16.mxu0 0
        %1129 = vmatpush2.bf16.msra.mxu0 0
        %1130 = vmatprep.subr.bf16.mxu0 0
        %1131 = vmatpush2.bf16.msra.mxu0 0
        %1132 = vmatprep.subr.bf16.mxu0 0
        %1133 = vmatpush2.bf16.msra.mxu0 0
        %1134 = vmatprep.subr.bf16.mxu0 0
        %1135 = vmatpush2.bf16.msra.mxu0 0
        %1136 = vmatprep.mubr.bf16.mxu0 0
        %1137 = vmatmul.mubr.bf16.gmra.mxu0 %v581
        %v1138 = vpop.f32.mrf.mxu0
        %v1139 = vadd.f32 %v1050, %v1138
        %v1140 = vpop.f32.mrf.mxu0
        %v1141 = vpop.f32.mrf.mxu0
        %v1142 = vadd.f32 %v1053, %v1141
        %v1143 = vpop.f32.mrf.mxu0
        %1144 = vdwg.mxu0
        %v1145 = vld [vmem:[#allocation11] sm:$0xf]
        %v1146 = vld [vmem:[#allocation11 + $0x4] sm:$0xf]
        %v1147 = vld [vmem:[#allocation11 + $0x8] sm:$0xf]
        %v1148 = vld [vmem:[#allocation11 + $0xc] sm:$0xf]
        %v1149 = vld [vmem:[#allocation11 + $0x10] sm:$0xf]
        %v1150 = vld [vmem:[#allocation11 + $0x14] sm:$0xf]
        %v1151 = vld [vmem:[#allocation11 + $0x18] sm:$0xf]
        %v1152 = vld [vmem:[#allocation11 + $0x1c] sm:$0xf]
        %v1153 = vld [vmem:[#allocation11 + $0x20] sm:$0xf]
        %v1154 = vld [vmem:[#allocation11 + $0x24] sm:$0xf]
        %v1155 = vld [vmem:[#allocation11 + $0x28] sm:$0xf]
        %v1156 = vld [vmem:[#allocation11 + $0x2c] sm:$0xf]
        %v1157 = vld [vmem:[#allocation11 + $0x30] sm:$0xf]
        %v1158 = vld [vmem:[#allocation11 + $0x34] sm:$0xf]
        %v1159 = vld [vmem:[#allocation11 + $0x38] sm:$0xf]
        %v1160 = vld [vmem:[#allocation11 + $0x3c] sm:$0xf]
        %v1177 = vunpack.c.l.b16 %v1145
        %v1178 = vunpack.c.l.b16 %v1146
        %v1179 = vunpack.c.l.b16 %v1147
        %v1180 = vunpack.c.l.b16 %v1148
        %v1181 = vunpack.c.l.b16 %v1149
        %v1182 = vunpack.c.l.b16 %v1150
        %v1183 = vunpack.c.l.b16 %v1151
        %v1184 = vunpack.c.l.b16 %v1152
        %v1185 = vunpack.c.l.b16 %v1153
        %v1186 = vunpack.c.l.b16 %v1154
        %v1187 = vunpack.c.l.b16 %v1155
        %v1188 = vunpack.c.l.b16 %v1156
        %v1189 = vunpack.c.l.b16 %v1157
        %v1190 = vunpack.c.l.b16 %v1158
        %v1191 = vunpack.c.l.b16 %v1159
        %v1192 = vunpack.c.l.b16 %v1160
        %v1193 = vpack.c.b16 %v1178, %v1177
        %v1194 = vpack.c.b16 %v1180, %v1179
        %v1195 = vpack.c.b16 %v1182, %v1181
        %v1196 = vpack.c.b16 %v1184, %v1183
        %v1197 = vpack.c.b16 %v1186, %v1185
        %v1198 = vpack.c.b16 %v1188, %v1187
        %v1199 = vpack.c.b16 %v1190, %v1189
        %v1200 = vpack.c.b16 %v1192, %v1191
        %1209 = vmatprep.subr.bf16.mxu0 0
        %1210 = vmatpush1.bf16.msra.mxu0 %v1200
        %1211 = vmatprep.subr.bf16.mxu0 0
        %1212 = vmatpush1.bf16.msra.mxu0 %v1199
        %1213 = vmatprep.subr.bf16.mxu0 0
        %1214 = vmatpush1.bf16.msra.mxu0 %v1198
        %1215 = vmatprep.subr.bf16.mxu0 0
        %1216 = vmatpush1.bf16.msra.mxu0 %v1197
        %1217 = vmatprep.subr.bf16.mxu0 0
        %1218 = vmatpush1.bf16.msra.mxu0 %v1196
        %1219 = vmatprep.subr.bf16.mxu0 0
        %1220 = vmatpush1.bf16.msra.mxu0 %v1195
        %1221 = vmatprep.subr.bf16.mxu0 0
        %1222 = vmatpush1.bf16.msra.mxu0 %v1194
        %1223 = vmatprep.subr.bf16.mxu0 0
        %1224 = vmatpush1.bf16.msra.mxu0 %v1193
        %1225 = vmatprep.subr.bf16.mxu0 0
        %1226 = vmatpush2.bf16.msra.mxu0 0
        %1227 = vmatprep.subr.bf16.mxu0 0
        %1228 = vmatpush2.bf16.msra.mxu0 0
        %1229 = vmatprep.subr.bf16.mxu0 0
        %1230 = vmatpush2.bf16.msra.mxu0 0
        %1231 = vmatprep.subr.bf16.mxu0 0
        %1232 = vmatpush2.bf16.msra.mxu0 0
        %1233 = vmatprep.subr.bf16.mxu0 0
        %1234 = vmatpush2.bf16.msra.mxu0 0
        %1235 = vmatprep.subr.bf16.mxu0 0
        %1236 = vmatpush2.bf16.msra.mxu0 0
        %1237 = vmatprep.subr.bf16.mxu0 0
        %1238 = vmatpush2.bf16.msra.mxu0 0
        %1239 = vmatprep.subr.bf16.mxu0 0
        %1240 = vmatpush2.bf16.msra.mxu0 0
        %1241 = vmatprep.mubr.bf16.mxu0 0
        %1242 = vmatmul.mubr.bf16.gmra.mxu0 %v934
        %v1243 = vpop.f32.mrf.mxu0
        %v1244 = vadd.f32 0.0, %v1243
        %v1245 = vpop.f32.mrf.mxu0
        %v1246 = vpop.f32.mrf.mxu0
        %v1247 = vadd.f32 0.0, %v1246
        %v1248 = vpop.f32.mrf.mxu0
        %1249 = vdwg.mxu0
        %v1250 = vadd.f32 %v1139, %v1244
        %v1251 = vadd.f32 %v1142, %v1247
        %v1252 = vld [vmem:[%s11] sm:$0x1]
        %v1254 = vlaneseq
        %v1255 = vshrl.u32 %v1254, 7
        %v1256 = vsub.s32 0, %v1255
        %v1257 = vrot.slane %v1252, %v1256
        %v1259 = vadd.f32 %v1250, %v1257
        %v1260 = vadd.f32 %v1251, %v1257
        %1261 = vst [vmem:[%s495] sm:$0xff] %v1259
        %1262 = vst [vmem:[%s495 + $0x8] sm:$0xff] %v1260
        %s1263 = sand.u32 %s295, 1
        %s1264 = scalar_lea.sflag [#allocation4], %s1263
        %s1265 = sand.u32 %s295, 1
        %s1266 = smul.addr %s1265, 16
        %s1267 = scalar_lea.vmem [#allocation13], %s1266
        // Predicated region
        $region93: #{tpu_custom_call.1} parent=67 // pred_check
          %p1268 = pneg %p305
        $region94: #{tpu_custom_call.1} parent=67 // pred_check_branch
          %1270 = sbr.rel (%p1268) target = $region96
        $region95: #{tpu_custom_call.1} parent=67 // pred_region
          %s1271 = smul.u32 2, %s30
          %s1273 = ssub.s32 256, 256
          %1274 = vsyncadd %s1264, %s1273
          %s1275 = smul.addr %s1271, 128
          %s1276 = scalar_lea.hbm %s12, %s1275
          %s1277 = sshll.u32 %s1267, 4
          %s1278 = int_to_ptr.vmem [resolvable:$true] %s1277
          %1283 = dma.vmem_to_hbm [thread:$0]  %s1278, 256, %s1276, %s1264, 128, 128, 8
        $region96: #{tpu_custom_call.1} parent=67 // pred_fallthru
          _
      $region68: #{tpu_custom_call.1} parent=5 // pred_fallthru
        _
      %p1284 = scmp.le.s32.totalorder 2, %s25
      // Predicated region
      $region97: #{tpu_custom_call.1} parent=5 // pred_check
        %p1285 = pneg %p1284
      $region98: #{tpu_custom_call.1} parent=5 // pred_check_branch
        %1287 = sbr.rel (%p1285) target = $region100
      $region99: #{tpu_custom_call.1} parent=5 // pred_region
        %s1288 = ssub.s32 %s25, 2
        // Predicated region
        $region101: #{tpu_custom_call.1} parent=99 // pred_check
          %p1289 = pneg %p311
        $region102: #{tpu_custom_call.1} parent=99 // pred_check_branch
          %1291 = sbr.rel (%p1289) target = $region104
        $region103: #{tpu_custom_call.1} parent=99 // pred_region
          %s1292 = sand.u32 %s296, 1
          %s1293 = scalar_lea.sflag [#allocation4], %s1292
          %s1294 = sand.u32 %s296, 1
          %s1295 = smul.addr %s1294, 16
          %s1296 = scalar_lea.vmem [#allocation13], %s1295
          %1297 = dma.done %s1293, 256
        $region104: #{tpu_custom_call.1} parent=99 // pred_fallthru
          _
      $region100: #{tpu_custom_call.1} parent=5 // pred_fallthru
        _
    $region6: #{tpu_custom_call.1} parent=1 // loop_footer
      %s29 = sadd.s32 1, %s25
    $region7: #{tpu_custom_call.1} parent=1 // loop_footer_branch
      %24 = sbr.rel target = $region3
    $region8: #{tpu_custom_call.1} parent=1 // loop_exit
      _
    %1298 = vsyncpa [#allocation3], 1
    %s1299 = scalar_lea.sflag [#allocation3], 1
    %1300 = vsyncpa %s1299, 1
    %1301 = vsyncpa [#allocation6], 1
    %1302 = vsyncpa [#allocation9], 1
    %1303 = vsyncpa [#allocation12], 1
    %1304 = vsyncpa [#allocation4], 1
    %s1305 = scalar_lea.sflag [#allocation4], 1
    %1306 = vsyncpa %s1305, 1

// kernel: tpu_custom_call.1
$region0: #{tpu_custom_call.1}
  #allocation0 [shape = 'u32[]', space=smem, size = 0x4, offset = 0x4, fixed_abs, tag = 'smem constant byte address 0x4 - core index']
  #allocation1 [shape = 'u32[144,128]{1,0:T(1,128)}', space=vmem, size = 0x12000, scoped, tag = 'internal scratch']
  %s0 = inlined_call_operand.vmem [shape: bf16[32,24], index: 0, kind: input, shape index: {}]
  %s1 = inlined_call_operand.vmem [shape: bf16[24,128], index: 1, kind: input, shape index: {}]
  %s2 = inlined_call_operand.vmem [shape: f32[1,128], index: 2, kind: input, shape index: {}]
  %s3 = inlined_call_operand.hbm [shape: bf16[128,128], index: 3, kind: input, shape index: {}]
  %s4 = inlined_call_operand.vmem [shape: f32[1,128], index: 4, kind: input, shape index: {}]
  %s5 = inlined_call_operand.hbm [shape: bf16[128,128], index: 5, kind: input, shape index: {}]
  %s6 = inlined_call_operand.hbm [shape: bf16[128,128], index: 6, kind: input, shape index: {}]
  %s7 = inlined_call_operand.vmem [shape: f32[1,128], index: 7, kind: input, shape index: {}]
  %s8 = inlined_call_operand.hbm [shape: bf16[128,128], index: 8, kind: input, shape index: {}]
  %s9 = inlined_call_operand.hbm [shape: bf16[128,128], index: 9, kind: input, shape index: {}]
  %s10 = inlined_call_operand.hbm [shape: bf16[128,128], index: 10, kind: input, shape index: {}]
  %s11 = inlined_call_operand.vmem [shape: f32[1,128], index: 11, kind: input, shape index: {}]
  %s12 = inlined_call_operand.hbm [shape: f32[32,128], index: 12, kind: output, shape index: {}]
  %s13 = sld [smem:[#allocation0]]
  $region105: #{tpu_custom_call.1} parent=0
    _
  %s15 = ssub.s32 1, %s13
  %s16 = scalar_select 0, %s15, %s13
  $region1: #{tpu_custom_call.1} parent=0
    #allocation2 [shape = 'u8[32768]{0}', space=vmem, size = 0x8000, scoped, tag = 'input window, operand 3, single buffered']
    #allocation3 [shape = 's32[2]{0}', space=sflag, size = 0x8, scoped, tag = 'scoped memory for tpu_custom_call.1']
    #allocation4 [shape = 's32[2]{0}', space=sflag, size = 0x8, scoped, tag = 'scoped memory for tpu_custom_call.1']
    #allocation5 [shape = 'u8[32768]{0}', space=vmem, size = 0x8000, scoped, tag = 'input window, operand 5, single buffered']
    #allocation6 [shape = 's32[1]{0}', space=sflag, size = 0x4, scoped, tag = 'scoped memory for tpu_custom_call.1']
    #allocation7 [shape = 'u8[32768]{0}', space=vmem, size = 0x8000, scoped, tag = 'input window, operand 6, single buffered']
    #allocation8 [shape = 'u8[32768]{0}', space=vmem, size = 0x8000, scoped, tag = 'input window, operand 8, single buffered']
    #allocation9 [shape = 's32[1]{0}', space=sflag, size = 0x4, scoped, tag = 'scoped memory for tpu_custom_call.1']
    #allocation10 [shape = 'u8[32768]{0}', space=vmem, size = 0x8000, scoped, tag = 'input window, operand 9, single buffered']
    #allocation11 [shape = 'u8[32768]{0}', space=vmem, size = 0x8000, scoped, tag = 'input window, operand 10, single buffered']
    #allocation12 [shape = 's32[1]{0}', space=sflag, size = 0x4, scoped, tag = 'scoped memory for tpu_custom_call.1']
    #allocation13 [shape = 'u8[16384]{0}', space=vmem, size = 0x4000, scoped, tag = 'output window, operand 0']
    %17 = vsyncpa [#allocation3], 0
    %18 = vsyncpa [#allocation6], 0
    %19 = vsyncpa [#allocation9], 0
    %20 = vsyncpa [#allocation12], 0
    %21 = vsyncpa [#allocation4], 0
    %s22 = scalar_lea.sflag [#allocation4], 1
    %23 = vsyncpa %s22, 0
    loop: start=0, step=1, limit=4
    $region2: #{tpu_custom_call.1} parent=1 // loop_pre_header
      _
    $region3: #{tpu_custom_call.1} parent=1 // loop_header
      %s25 = sphi 0, %s29
      %p26 = scmp.ge.s32.totalorder %s25, 4
      %s35 = sphi 0, %s37
      %s38 = sphi 0, %s35
      %s39 = sphi 0, %s38
      %s55 = sphi 0, %s39
      %s59 = sphi 0, %s59
      %s61 = sphi 0, %s59
      %s62 = sphi 0, %s61
      %s76 = sphi 0, %s62
      %s80 = sphi 0, %s80
      %s82 = sphi 0, %s80
      %s83 = sphi 0, %s82
      %s97 = sphi 0, %s83
      %s101 = sphi 0, %s101
      %s103 = sphi 0, %s101
      %s104 = sphi 0, %s103
      %s118 = sphi 0, %s104
      %s122 = sphi 0, %s122
      %s124 = sphi 0, %s122
      %s125 = sphi 0, %s124
      %s139 = sphi 0, %s125
      %s143 = sphi 0, %s143
      %s145 = sphi 0, %s143
      %s146 = sphi 0, %s145
      %s160 = sphi 0, %s146
      %s164 = sphi 0, %s164
      %s166 = sphi 0, %s164
      %s167 = sphi 0, %s166
      %s181 = sphi 0, %s167
      %s185 = sphi 0, %s185
      %s187 = sphi 0, %s185
      %s188 = sphi 0, %s187
      %s202 = sphi 0, %s188
      %s206 = sphi 0, %s206
      %s208 = sphi 0, %s206
      %s209 = sphi 0, %s208
      %s223 = sphi 0, %s209
      %s227 = sphi 0, %s227
      %s229 = sphi 0, %s227
      %s230 = sphi 0, %s229
      %s244 = sphi 0, %s230
      %s248 = sphi 0, %s248
      %s250 = sphi 0, %s248
      %s251 = sphi 0, %s250
      %s265 = sphi 0, %s251
      %s269 = sphi 0, %s269
      %s271 = sphi 0, %s269
      %s272 = sphi 0, %s271
      %s286 = sphi 0, %s272
      %s292 = sphi 0, %s294
      %s295 = sphi 0, %s292
      %s296 = sphi 0, %s295
      %s312 = sphi 0, %s296
    $region4: #{tpu_custom_call.1} parent=1 // loop_header_branch
      %28 = sbr.rel (%p26) target = $region8
    $region5: #{tpu_custom_call.1} parent=1 // loop_body
      %s30 = ssub.s32 %s25, 1
      %s31 = ssub.s32 %s25, 2
      %s32 = sadd.s32 %s25, 1
      %s33 = ssub.s32 %s25, %s32
      %p34 = scmp.eq.s32.totalorder %s33, 0
      %s36 = sadd.s32 %s35, 1
      %s37 = scalar_select %p34, %s35, %s36
      %p40 = pneg %p34
      %p41 = scmp.eq.s32.totalorder %s25, 1
      %p42 = por %p40, %p41
      %p43 = scmp.ne.s32.totalorder %s35, %s38
      %p44 = scmp.eq.s32.totalorder %s25, 0
      %p45 = por %p43, %p44
      %p46 = scmp.ne.s32.totalorder %s35, %s38
      %p47 = scmp.eq.s32.totalorder %s30, 1
      %p48 = por %p46, %p47
      %p49 = scmp.ne.s32.totalorder %s38, %s39
      %p50 = scmp.eq.s32.totalorder %s30, 0
      %p51 = por %p49, %p50
      %p52 = scmp.ne.s32.totalorder %s38, %s39
      %p53 = scmp.eq.s32.totalorder %s31, 1
      %p54 = por %p52, %p53
      %p56 = scmp.ne.s32.totalorder %s39, %s55
      %p57 = scmp.eq.s32.totalorder %s31, 0
      %p58 = por %p56, %p57
      %s60 = sadd.s32 %s59, 1
      %p63 = scmp.eq.s32.totalorder %s25, 1
      %p64 = scmp.ne.s32.totalorder %s59, %s61
      %p65 = scmp.eq.s32.totalorder %s25, 0
      %p66 = por %p64, %p65
      %p67 = scmp.ne.s32.totalorder %s59, %s61
      %p68 = scmp.eq.s32.totalorder %s30, 1
      %p69 = por %p67, %p68
      %p70 = scmp.ne.s32.totalorder %s61, %s62
      %p71 = scmp.eq.s32.totalorder %s30, 0
      %p72 = por %p70, %p71
      %p73 = scmp.ne.s32.totalorder %s61, %s62
      %p74 = scmp.eq.s32.totalorder %s31, 1
      %p75 = por %p73, %p74
      %p77 = scmp.ne.s32.totalorder %s62, %s76
      %p78 = scmp.eq.s32.totalorder %s31, 0
      %p79 = por %p77, %p78
      %s81 = sadd.s32 %s80, 1
      %p84 = scmp.eq.s32.totalorder %s25, 1
      %p85 = scmp.ne.s32.totalorder %s80, %s82
      %p86 = scmp.eq.s32.totalorder %s25, 0
      %p87 = por %p85, %p86
      %p88 = scmp.ne.s32.totalorder %s80, %s82
      %p89 = scmp.eq.s32.totalorder %s30, 1
      %p90 = por %p88, %p89
      %p91 = scmp.ne.s32.totalorder %s82, %s83
      %p92 = scmp.eq.s32.totalorder %s30, 0
      %p93 = por %p91, %p92
      %p94 = scmp.ne.s32.totalorder %s82, %s83
      %p95 = scmp.eq.s32.totalorder %s31, 1
      %p96 = por %p94, %p95
      %p98 = scmp.ne.s32.totalorder %s83, %s97
      %p99 = scmp.eq.s32.totalorder %s31, 0
      %p100 = por %p98, %p99
      %s102 = sadd.s32 %s101, 1
      %p105 = scmp.eq.s32.totalorder %s25, 1
      %p106 = scmp.ne.s32.totalorder %s101, %s103
      %p107 = scmp.eq.s32.totalorder %s25, 0
      %p108 = por %p106, %p107
      %p109 = scmp.ne.s32.totalorder %s101, %s103
      %p110 = scmp.eq.s32.totalorder %s30, 1
      %p111 = por %p109, %p110
      %p112 = scmp.ne.s32.totalorder %s103, %s104
      %p113 = scmp.eq.s32.totalorder %s30, 0
      %p114 = por %p112, %p113
      %p115 = scmp.ne.s32.totalorder %s103, %s104
      %p116 = scmp.eq.s32.totalorder %s31, 1
      %p117 = por %p115, %p116
      %p119 = scmp.ne.s32.totalorder %s104, %s118
      %p120 = scmp.eq.s32.totalorder %s31, 0
      %p121 = por %p119, %p120
      %s123 = sadd.s32 %s122, 1
      %p126 = scmp.eq.s32.totalorder %s25, 1
      %p127 = scmp.ne.s32.totalorder %s122, %s124
      %p128 = scmp.eq.s32.totalorder %s25, 0
      %p129 = por %p127, %p128
      %p130 = scmp.ne.s32.totalorder %s122, %s124
      %p131 = scmp.eq.s32.totalorder %s30, 1
      %p132 = por %p130, %p131
      %p133 = scmp.ne.s32.totalorder %s124, %s125
      %p134 = scmp.eq.s32.totalorder %s30, 0
      %p135 = por %p133, %p134
      %p136 = scmp.ne.s32.totalorder %s124, %s125
      %p137 = scmp.eq.s32.totalorder %s31, 1
      %p138 = por %p136, %p137
      %p140 = scmp.ne.s32.totalorder %s125, %s139
      %p141 = scmp.eq.s32.totalorder %s31, 0
      %p142 = por %p140, %p141
      %s144 = sadd.s32 %s143, 1
      %p147 = scmp.eq.s32.totalorder %s25, 1
      %p148 = scmp.ne.s32.totalorder %s143, %s145
      %p149 = scmp.eq.s32.totalorder %s25, 0
      %p150 = por %p148, %p149
      %p151 = scmp.ne.s32.totalorder %s143, %s145
      %p152 = scmp.eq.s32.totalorder %s30, 1
      %p153 = por %p151, %p152
      %p154 = scmp.ne.s32.totalorder %s145, %s146
      %p155 = scmp.eq.s32.totalorder %s30, 0
      %p156 = por %p154, %p155
      %p157 = scmp.ne.s32.totalorder %s145, %s146
      %p158 = scmp.eq.s32.totalorder %s31, 1
      %p159 = por %p157, %p158
      %p161 = scmp.ne.s32.totalorder %s146, %s160
      %p162 = scmp.eq.s32.totalorder %s31, 0
      %p163 = por %p161, %p162
      %s165 = sadd.s32 %s164, 1
      %p168 = scmp.eq.s32.totalorder %s25, 1
      %p169 = scmp.ne.s32.totalorder %s164, %s166
      %p170 = scmp.eq.s32.totalorder %s25, 0
      %p171 = por %p169, %p170
      %p172 = scmp.ne.s32.totalorder %s164, %s166
      %p173 = scmp.eq.s32.totalorder %s30, 1
      %p174 = por %p172, %p173
      %p175 = scmp.ne.s32.totalorder %s166, %s167
      %p176 = scmp.eq.s32.totalorder %s30, 0
      %p177 = por %p175, %p176
      %p178 = scmp.ne.s32.totalorder %s166, %s167
      %p179 = scmp.eq.s32.totalorder %s31, 1
      %p180 = por %p178, %p179
      %p182 = scmp.ne.s32.totalorder %s167, %s181
      %p183 = scmp.eq.s32.totalorder %s31, 0
      %p184 = por %p182, %p183
      %s186 = sadd.s32 %s185, 1
      %p189 = scmp.eq.s32.totalorder %s25, 1
      %p190 = scmp.ne.s32.totalorder %s185, %s187
      %p191 = scmp.eq.s32.totalorder %s25, 0
      %p192 = por %p190, %p191
      %p193 = scmp.ne.s32.totalorder %s185, %s187
      %p194 = scmp.eq.s32.totalorder %s30, 1
      %p195 = por %p193, %p194
      %p196 = scmp.ne.s32.totalorder %s187, %s188
      %p197 = scmp.eq.s32.totalorder %s30, 0
      %p198 = por %p196, %p197
      %p199 = scmp.ne.s32.totalorder %s187, %s188
      %p200 = scmp.eq.s32.totalorder %s31, 1
      %p201 = por %p199, %p200
      %p203 = scmp.ne.s32.totalorder %s188, %s202
      %p204 = scmp.eq.s32.totalorder %s31, 0
      %p205 = por %p203, %p204
      %s207 = sadd.s32 %s206, 1
      %p210 = scmp.eq.s32.totalorder %s25, 1
      %p211 = scmp.ne.s32.totalorder %s206, %s208
      %p212 = scmp.eq.s32.totalorder %s25, 0
      %p213 = por %p211, %p212
      %p214 = scmp.ne.s32.totalorder %s206, %s208
      %p215 = scmp.eq.s32.totalorder %s30, 1
      %p216 = por %p214, %p215
      %p217 = scmp.ne.s32.totalorder %s208, %s209
      %p218 = scmp.eq.s32.totalorder %s30, 0
      %p219 = por %p217, %p218
      %p220 = scmp.ne.s32.totalorder %s208, %s209
      %p221 = scmp.eq.s32.totalorder %s31, 1
      %p222 = por %p220, %p221
      %p224 = scmp.ne.s32.totalorder %s209, %s223
      %p225 = scmp.eq.s32.totalorder %s31, 0
      %p226 = por %p224, %p225
      %s228 = sadd.s32 %s227, 1
      %p231 = scmp.eq.s32.totalorder %s25, 1
      %p232 = scmp.ne.s32.totalorder %s227, %s229
      %p233 = scmp.eq.s32.totalorder %s25, 0
      %p234 = por %p232, %p233
      %p235 = scmp.ne.s32.totalorder %s227, %s229
      %p236 = scmp.eq.s32.totalorder %s30, 1
      %p237 = por %p235, %p236
      %p238 = scmp.ne.s32.totalorder %s229, %s230
      %p239 = scmp.eq.s32.totalorder %s30, 0
      %p240 = por %p238, %p239
      %p241 = scmp.ne.s32.totalorder %s229, %s230
      %p242 = scmp.eq.s32.totalorder %s31, 1
      %p243 = por %p241, %p242
      %p245 = scmp.ne.s32.totalorder %s230, %s244
      %p246 = scmp.eq.s32.totalorder %s31, 0
      %p247 = por %p245, %p246
      %s249 = sadd.s32 %s248, 1
      %p252 = scmp.eq.s32.totalorder %s25, 1
      %p253 = scmp.ne.s32.totalorder %s248, %s250
      %p254 = scmp.eq.s32.totalorder %s25, 0
      %p255 = por %p253, %p254
      %p256 = scmp.ne.s32.totalorder %s248, %s250
      %p257 = scmp.eq.s32.totalorder %s30, 1
      %p258 = por %p256, %p257
      %p259 = scmp.ne.s32.totalorder %s250, %s251
      %p260 = scmp.eq.s32.totalorder %s30, 0
      %p261 = por %p259, %p260
      %p262 = scmp.ne.s32.totalorder %s250, %s251
      %p263 = scmp.eq.s32.totalorder %s31, 1
      %p264 = por %p262, %p263
      %p266 = scmp.ne.s32.totalorder %s251, %s265
      %p267 = scmp.eq.s32.totalorder %s31, 0
      %p268 = por %p266, %p267
      %s270 = sadd.s32 %s269, 1
      %p273 = scmp.eq.s32.totalorder %s25, 1
      %p274 = scmp.ne.s32.totalorder %s269, %s271
      %p275 = scmp.eq.s32.totalorder %s25, 0
      %p276 = por %p274, %p275
      %p277 = scmp.ne.s32.totalorder %s269, %s271
      %p278 = scmp.eq.s32.totalorder %s30, 1
      %p279 = por %p277, %p278
      %p280 = scmp.ne.s32.totalorder %s271, %s272
      %p281 = scmp.eq.s32.totalorder %s30, 0
      %p282 = por %p280, %p281
      %p283 = scmp.ne.s32.totalorder %s271, %s272
      %p284 = scmp.eq.s32.totalorder %s31, 1
      %p285 = por %p283, %p284
      %p287 = scmp.ne.s32.totalorder %s272, %s286
      %p288 = scmp.eq.s32.totalorder %s31, 0
      %p289 = por %p287, %p288
      %s290 = ssub.s32 %s25, %s32
      %p291 = scmp.eq.s32.totalorder %s290, 0
      %s293 = sadd.s32 %s292, 1
      %s294 = scalar_select %p291, %s292, %s293
      %p297 = pneg %p291
      %p298 = scmp.eq.s32.totalorder %s25, 1
      %p299 = por %p297, %p298
      %p300 = scmp.ne.s32.totalorder %s292, %s295
      %p301 = scmp.eq.s32.totalorder %s25, 0
      %p302 = por %p300, %p301
      %p303 = scmp.ne.s32.totalorder %s292, %s295
      %p304 = scmp.eq.s32.totalorder %s30, 1
      %p305 = por %p303, %p304
      %p306 = scmp.ne.s32.totalorder %s295, %s296
      %p307 = scmp.eq.s32.totalorder %s30, 0
      %p308 = por %p306, %p307
      %p309 = scmp.ne.s32.totalorder %s295, %s296
      %p310 = scmp.eq.s32.totalorder %s31, 1
      %p311 = por %p309, %p310
      %p313 = scmp.ne.s32.totalorder %s296, %s312
      %p314 = scmp.eq.s32.totalorder %s31, 0
      %p315 = por %p313, %p314
      %p316 = scmp.le.s32.totalorder 1, %s25
      %p317 = scmp.lt.s32.totalorder %s25, 3
      %p318 = pnand %p316, %p317
      %p319 = pneg %p318
      // Predicated region
      $region9: #{tpu_custom_call.1} parent=5 // pred_check
        _
      $region10: #{tpu_custom_call.1} parent=5 // pred_check_branch
        %321 = sbr.rel (%p318) target = $region12
      $region11: #{tpu_custom_call.1} parent=5 // pred_region
        %s322 = ssub.s32 %s25, 1
        // Predicated region
        $region13: #{tpu_custom_call.1} parent=11 // pred_check
          %p323 = pneg %p72
        $region14: #{tpu_custom_call.1} parent=11 // pred_check_branch
          %325 = sbr.rel (%p323) target = $region16
        $region15: #{tpu_custom_call.1} parent=11 // pred_region
          _
        $region16: #{tpu_custom_call.1} parent=11 // pred_fallthru
          _
        // Predicated region
        $region17: #{tpu_custom_call.1} parent=11 // pred_check
          %p326 = pneg %p93
        $region18: #{tpu_custom_call.1} parent=11 // pred_check_branch
          %328 = sbr.rel (%p326) target = $region20
        $region19: #{tpu_custom_call.1} parent=11 // pred_region
          _
        $region20: #{tpu_custom_call.1} parent=11 // pred_fallthru
          _
        // Predicated region
        $region21: #{tpu_custom_call.1} parent=11 // pred_check
          %p329 = pneg %p114
        $region22: #{tpu_custom_call.1} parent=11 // pred_check_branch
          %331 = sbr.rel (%p329) target = $region24
        $region23: #{tpu_custom_call.1} parent=11 // pred_region
          %s333 = ssub.s32 1024, 1024
          %334 = vsyncadd [#allocation3], %s333
          %s335 = sshll.u32 [#allocation2], 4
          %s336 = int_to_ptr.vmem [resolvable:$true] %s335
          %341 = dma.hbm_to_vmem [thread:$0]  %s3, 1024, %s336, [#allocation3], 64, 64, 4
        $region24: #{tpu_custom_call.1} parent=11 // pred_fallthru
          _
        // Predicated region
        $region25: #{tpu_custom_call.1} parent=11 // pred_check
          %p342 = pneg %p135
        $region26: #{tpu_custom_call.1} parent=11 // pred_check_branch
          %344 = sbr.rel (%p342) target = $region28
        $region27: #{tpu_custom_call.1} parent=11 // pred_region
          _
        $region28: #{tpu_custom_call.1} parent=11 // pred_fallthru
          _
        // Predicated region
        $region29: #{tpu_custom_call.1} parent=11 // pred_check
          %p345 = pneg %p156
        $region30: #{tpu_custom_call.1} parent=11 // pred_check_branch
          %347 = sbr.rel (%p345) target = $region32
        $region31: #{tpu_custom_call.1} parent=11 // pred_region
          %s349 = ssub.s32 1024, 1024
          %350 = vsyncadd [#allocation6], %s349
          %s351 = sshll.u32 [#allocation5], 4
          %s352 = int_to_ptr.vmem [resolvable:$true] %s351
          %357 = dma.hbm_to_vmem [thread:$0]  %s5, 1024, %s352, [#allocation6], 64, 64, 4
        $region32: #{tpu_custom_call.1} parent=11 // pred_fallthru
          _
        // Predicated region
        $region33: #{tpu_custom_call.1} parent=11 // pred_check
          %p358 = pneg %p177
        $region34: #{tpu_custom_call.1} parent=11 // pred_check_branch
          %360 = sbr.rel (%p358) target = $region36
        $region35: #{tpu_custom_call.1} parent=11 // pred_region
          %s362 = ssub.s32 1024, 1024
          %363 = vsyncadd [#allocation6], %s362
          %s364 = sshll.u32 [#allocation7], 4
          %s365 = int_to_ptr.vmem [resolvable:$true] %s364
          %370 = dma.hbm_to_vmem [thread:$0]  %s6, 1024, %s365, [#allocation6], 64, 64, 4
        $region36: #{tpu_custom_call.1} parent=11 // pred_fallthru
          _
        // Predicated region
        $region37: #{tpu_custom_call.1} parent=11 // pred_check
          %p371 = pneg %p198
        $region38: #{tpu_custom_call.1} parent=11 // pred_check_branch
          %373 = sbr.rel (%p371) target = $region40
        $region39: #{tpu_custom_call.1} parent=11 // pred_region
          _
        $region40: #{tpu_custom_call.1} parent=11 // pred_fallthru
          _
        // Predicated region
        $region41: #{tpu_custom_call.1} parent=11 // pred_check
          %p374 = pneg %p219
        $region42: #{tpu_custom_call.1} parent=11 // pred_check_branch
          %376 = sbr.rel (%p374) target = $region44
        $region43: #{tpu_custom_call.1} parent=11 // pred_region
          %s378 = ssub.s32 1024, 1024
          %379 = vsyncadd [#allocation9], %s378
          %s380 = sshll.u32 [#allocation8], 4
          %s381 = int_to_ptr.vmem [resolvable:$true] %s380
          %386 = dma.hbm_to_vmem [thread:$0]  %s8, 1024, %s381, [#allocation9], 64, 64, 4
        $region44: #{tpu_custom_call.1} parent=11 // pred_fallthru
          _
        // Predicated region
        $region45: #{tpu_custom_call.1} parent=11 // pred_check
          %p387 = pneg %p240
        $region46: #{tpu_custom_call.1} parent=11 // pred_check_branch
          %389 = sbr.rel (%p387) target = $region48
        $region47: #{tpu_custom_call.1} parent=11 // pred_region
          %s391 = ssub.s32 1024, 1024
          %392 = vsyncadd [#allocation9], %s391
          %s393 = sshll.u32 [#allocation10], 4
          %s394 = int_to_ptr.vmem [resolvable:$true] %s393
          %399 = dma.hbm_to_vmem [thread:$0]  %s9, 1024, %s394, [#allocation9], 64, 64, 4
        $region48: #{tpu_custom_call.1} parent=11 // pred_fallthru
          _
        // Predicated region
        $region49: #{tpu_custom_call.1} parent=11 // pred_check
          %p400 = pneg %p261
        $region50: #{tpu_custom_call.1} parent=11 // pred_check_branch
          %402 = sbr.rel (%p400) target = $region52
        $region51: #{tpu_custom_call.1} parent=11 // pred_region
          %s404 = ssub.s32 1024, 1024
          %405 = vsyncadd [#allocation12], %s404
          %s406 = sshll.u32 [#allocation11], 4
          %s407 = int_to_ptr.vmem [resolvable:$true] %s406
          %412 = dma.hbm_to_vmem [thread:$0]  %s10, 1024, %s407, [#allocation12], 64, 64, 4
        $region52: #{tpu_custom_call.1} parent=11 // pred_fallthru
          _
        // Predicated region
        $region53: #{tpu_custom_call.1} parent=11 // pred_check
          %p413 = pneg %p282
        $region54: #{tpu_custom_call.1} parent=11 // pred_check_branch
          %415 = sbr.rel (%p413) target = $region56
        $region55: #{tpu_custom_call.1} parent=11 // pred_region
          _
        $region56: #{tpu_custom_call.1} parent=11 // pred_fallthru
          _
      $region12: #{tpu_custom_call.1} parent=5 // pred_fallthru
        _
      %p416 = scmp.lt.s32.totalorder %s25, 2
      // Predicated region
      $region57: #{tpu_custom_call.1} parent=5 // pred_check
        %p417 = pneg %p416
      $region58: #{tpu_custom_call.1} parent=5 // pred_check_branch
        %419 = sbr.rel (%p417) target = $region60
      $region59: #{tpu_custom_call.1} parent=5 // pred_region
        // Predicated region
        $region61: #{tpu_custom_call.1} parent=59 // pred_check
          %p420 = pneg %p45
        $region62: #{tpu_custom_call.1} parent=59 // pred_check_branch
          %422 = sbr.rel (%p420) target = $region64
        $region63: #{tpu_custom_call.1} parent=59 // pred_region
          %s423 = smul.u32 2, %s25
          %p424 = scmp.lt.s32.totalorder %s423, 3
          %s425 = scalar_select %p424, %s423, 3
          %s426 = smul.addr %s425, 4
          %s427 = scalar_lea.vmem %s0, %s426
          %s428 = smul.u32 2, %s25
        $region64: #{tpu_custom_call.1} parent=59 // pred_fallthru
          _
      $region60: #{tpu_custom_call.1} parent=5 // pred_fallthru
        _
      %p429 = scmp.le.s32.totalorder 1, %s25
      %p430 = scmp.lt.s32.totalorder %s25, 3
      %p431 = pnand %p429, %p430
      %p432 = pneg %p431
      // Predicated region
      $region65: #{tpu_custom_call.1} parent=5 // pred_check
        _
      $region66: #{tpu_custom_call.1} parent=5 // pred_check_branch
        %434 = sbr.rel (%p431) target = $region68
      $region67: #{tpu_custom_call.1} parent=5 // pred_region
        %s435 = ssub.s32 %s25, 1
        // Predicated region
        $region69: #{tpu_custom_call.1} parent=67 // pred_check
          %p436 = pneg %p114
        $region70: #{tpu_custom_call.1} parent=67 // pred_check_branch
          %438 = sbr.rel (%p436) target = $region72
        $region71: #{tpu_custom_call.1} parent=67 // pred_region
          %439 = dma.done [#allocation3], 1024
        $region72: #{tpu_custom_call.1} parent=67 // pred_fallthru
          _
        // Predicated region
        $region73: #{tpu_custom_call.1} parent=67 // pred_check
          %p440 = pneg %p156
        $region74: #{tpu_custom_call.1} parent=67 // pred_check_branch
          %442 = sbr.rel (%p440) target = $region76
        $region75: #{tpu_custom_call.1} parent=67 // pred_region
          %443 = dma.done [#allocation6], 1024
        $region76: #{tpu_custom_call.1} parent=67 // pred_fallthru
          _
        // Predicated region
        $region77: #{tpu_custom_call.1} parent=67 // pred_check
          %p444 = pneg %p177
        $region78: #{tpu_custom_call.1} parent=67 // pred_check_branch
          %446 = sbr.rel (%p444) target = $region80
        $region79: #{tpu_custom_call.1} parent=67 // pred_region
          %447 = dma.done [#allocation6], 1024
        $region80: #{tpu_custom_call.1} parent=67 // pred_fallthru
          _
        // Predicated region
        $region81: #{tpu_custom_call.1} parent=67 // pred_check
          %p448 = pneg %p219
        $region82: #{tpu_custom_call.1} parent=67 // pred_check_branch
          %450 = sbr.rel (%p448) target = $region84
        $region83: #{tpu_custom_call.1} parent=67 // pred_region
          %451 = dma.done [#allocation9], 1024
        $region84: #{tpu_custom_call.1} parent=67 // pred_fallthru
          _
        // Predicated region
        $region85: #{tpu_custom_call.1} parent=67 // pred_check
          %p452 = pneg %p240
        $region86: #{tpu_custom_call.1} parent=67 // pred_check_branch
          %454 = sbr.rel (%p452) target = $region88
        $region87: #{tpu_custom_call.1} parent=67 // pred_region
          %455 = dma.done [#allocation9], 1024
        $region88: #{tpu_custom_call.1} parent=67 // pred_fallthru
          _
        // Predicated region
        $region89: #{tpu_custom_call.1} parent=67 // pred_check
          %p456 = pneg %p261
        $region90: #{tpu_custom_call.1} parent=67 // pred_check_branch
          %458 = sbr.rel (%p456) target = $region92
        $region91: #{tpu_custom_call.1} parent=67 // pred_region
          %459 = dma.done [#allocation12], 1024
        $region92: #{tpu_custom_call.1} parent=67 // pred_fallthru
          _
        %s460 = smul.u32 2, %s30
        %p461 = scmp.lt.s32.totalorder %s460, 3
        %s462 = scalar_select %p461, %s460, 3
        %s463 = smul.addr %s462, 4
        %s464 = scalar_lea.vmem %s0, %s463
        %p465 = pneg %p51
        %p466 = pneg %p48
        %p467 = pneg %p72
        %p468 = pneg %p69
        %p469 = pneg %p93
        %p470 = pneg %p90
        %p471 = pneg %p114
        %p472 = pneg %p111
        %p473 = pneg %p135
        %p474 = pneg %p132
        %p475 = pneg %p156
        %p476 = pneg %p153
        %p477 = pneg %p177
        %p478 = pneg %p174
        %p479 = pneg %p198
        %p480 = pneg %p195
        %p481 = pneg %p219
        %p482 = pneg %p216
        %p483 = pneg %p240
        %p484 = pneg %p237
        %p485 = pneg %p261
        %p486 = pneg %p258
        %p487 = pneg %p282
        %p488 = pneg %p279
        %p489 = pneg %p308
        %p490 = pneg %p305
        %s491 = sand.u32 %s295, 1
        %s492 = scalar_lea.sflag [#allocation4], %s491
        %s493 = sand.u32 %s295, 1
        %s494 = smul.addr %s493, 16
        %s495 = scalar_lea.vmem [#allocation13], %s494
        %s496 = smul.u32 2, %s30
        %p497 = scmp.lt.s32.totalorder %s496, 3
        %s498 = scalar_select %p497, %s496, 3
        %s499 = smul.addr %s498, 4
        %s500 = scalar_lea.vmem %s0, %s499
        %s501 = smul.u32 2, %s30
        %s502 = smul.u32 2, %s30
        %v504 = vld [vmem:[%s500] sm:$0xf]
        %v505 = vld [vmem:[%s500 + $0x4] sm:$0xf]
        %v506 = vld [vmem:[%s1] sm:$0xf]
        %v507 = vld [vmem:[%s1 + $0x4] sm:$0xf]
        %v508 = vld [vmem:[%s1 + $0x8] sm:$0xf]
        %v509 = vld [vmem:[%s2] sm:$0x1]
        %v511 = vlaneseq
        %v512 = vshrl.u32 %v511, 7
        %v513 = vsub.s32 0, %v512
        %v514 = vrot.slane %v509, %v513
        %v518 = vunpack.c.l.b16 %v504
        %v519 = vunpack.c.l.b16 %v505
        %v520 = vpack.c.b16 %v519, %v518
        %v524 = vunpack.c.l.b16 %v506
        %v525 = vunpack.c.l.b16 %v507
        %v526 = vunpack.c.l.b16 %v508
        %v527 = vpack.c.b16 %v525, %v524
        %v528 = vpack.c.b16 %v526, %v526
        %vm530 = vcmask 195584
        %v532 = vsel %vm530, %v520, 0
        %vm534 = vcmask 1043456
        %v536 = vsel %vm534, %v528, 0
        %538 = vmatprep.subr.bf16.mxu0 0
        %539 = vmatpush1.bf16.msra.mxu0 0
        %540 = vmatprep.subr.bf16.mxu0 0
        %541 = vmatpush1.bf16.msra.mxu0 0
        %542 = vmatprep.subr.bf16.mxu0 0
        %543 = vmatpush1.bf16.msra.mxu0 0
        %544 = vmatprep.subr.bf16.mxu0 0
        %545 = vmatpush1.bf16.msra.mxu0 0
        %546 = vmatprep.subr.bf16.mxu0 0
        %547 = vmatpush1.bf16.msra.mxu0 0
        %548 = vmatprep.subr.bf16.mxu0 0
        %549 = vmatpush1.bf16.msra.mxu0 0
        %550 = vmatprep.subr.bf16.mxu0 0
        %551 = vmatpush1.bf16.msra.mxu0 %v536
        %552 = vmatprep.subr.bf16.mxu0 0
        %553 = vmatpush1.bf16.msra.mxu0 %v527
        %554 = vmatprep.subr.bf16.mxu0 0
        %555 = vmatpush2.bf16.msra.mxu0 0
        %556 = vmatprep.subr.bf16.mxu0 0
        %557 = vmatpush2.bf16.msra.mxu0 0
        %558 = vmatprep.subr.bf16.mxu0 0
        %559 = vmatpush2.bf16.msra.mxu0 0
        %560 = vmatprep.subr.bf16.mxu0 0
        %561 = vmatpush2.bf16.msra.mxu0 0
        %562 = vmatprep.subr.bf16.mxu0 0
        %563 = vmatpush2.bf16.msra.mxu0 0
        %564 = vmatprep.subr.bf16.mxu0 0
        %565 = vmatpush2.bf16.msra.mxu0 0
        %566 = vmatprep.subr.bf16.mxu0 0
        %567 = vmatpush2.bf16.msra.mxu0 0
        %568 = vmatprep.subr.bf16.mxu0 0
        %569 = vmatpush2.bf16.msra.mxu0 0
        %570 = vmatprep.mubr.bf16.mxu0 0
        %571 = vmatmul.mubr.bf16.gmra.mxu0 %v532
        %v572 = vpop.f32.mrf.mxu0
        %v573 = vadd.f32 %v514, %v572
        %v574 = vpop.f32.mrf.mxu0
        %v575 = vpop.f32.mrf.mxu0
        %v576 = vadd.f32 %v514, %v575
        %v577 = vpop.f32.mrf.mxu0
        %578 = vdwg.mxu0
        %v579 = vmax.f32 %v573, 0.0
        %v580 = vmax.f32 %v576, 0.0
        %v581 = vpack.c.bf16 %v580, %v579
        %v582 = vld [vmem:[#allocation2] sm:$0xf]
        %v583 = vld [vmem:[#allocation2 + $0x4] sm:$0xf]
        %v584 = vld [vmem:[#allocation2 + $0x8] sm:$0xf]
        %v585 = vld [vmem:[#allocation2 + $0xc] sm:$0xf]
        %v586 = vld [vmem:[#allocation2 + $0x10] sm:$0xf]
        %v587 = vld [vmem:[#allocation2 + $0x14] sm:$0xf]
        %v588 = vld [vmem:[#allocation2 + $0x18] sm:$0xf]
        %v589 = vld [vmem:[#allocation2 + $0x1c] sm:$0xf]
        %v590 = vld [vmem:[#allocation2 + $0x20] sm:$0xf]
        %v591 = vld [vmem:[#allocation2 + $0x24] sm:$0xf]
        %v592 = vld [vmem:[#allocation2 + $0x28] sm:$0xf]
        %v593 = vld [vmem:[#allocation2 + $0x2c] sm:$0xf]
        %v594 = vld [vmem:[#allocation2 + $0x30] sm:$0xf]
        %v595 = vld [vmem:[#allocation2 + $0x34] sm:$0xf]
        %v596 = vld [vmem:[#allocation2 + $0x38] sm:$0xf]
        %v597 = vld [vmem:[#allocation2 + $0x3c] sm:$0xf]
        %v598 = vld [vmem:[%s4] sm:$0x1]
        %v600 = vlaneseq
        %v601 = vshrl.u32 %v600, 7
        %v602 = vsub.s32 0, %v601
        %v603 = vrot.slane %v598, %v602
        %v621 = vunpack.c.l.b16 %v582
        %v622 = vunpack.c.l.b16 %v583
        %v623 = vunpack.c.l.b16 %v584
        %v624 = vunpack.c.l.b16 %v585
        %v625 = vunpack.c.l.b16 %v586
        %v626 = vunpack.c.l.b16 %v587
        %v627 = vunpack.c.l.b16 %v588
        %v628 = vunpack.c.l.b16 %v589
        %v629 = vunpack.c.l.b16 %v590
        %v630 = vunpack.c.l.b16 %v591
        %v631 = vunpack.c.l.b16 %v592
        %v632 = vunpack.c.l.b16 %v593
        %v633 = vunpack.c.l.b16 %v594
        %v634 = vunpack.c.l.b16 %v595
        %v635 = vunpack.c.l.b16 %v596
        %v636 = vunpack.c.l.b16 %v597
        %v637 = vpack.c.b16 %v622, %v621
        %v638 = vpack.c.b16 %v624, %v623
        %v639 = vpack.c.b16 %v626, %v625
        %v640 = vpack.c.b16 %v628, %v627
        %v641 = vpack.c.b16 %v630, %v629
        %v642 = vpack.c.b16 %v632, %v631
        %v643 = vpack.c.b16 %v634, %v633
        %v644 = vpack.c.b16 %v636, %v635
        %653 = vmatprep.subr.bf16.mxu0 0
        %654 = vmatpush1.bf16.msra.mxu0 %v644
        %655 = vmatprep.subr.bf16.mxu0 0
        %656 = vmatpush1.bf16.msra.mxu0 %v643
        %657 = vmatprep.subr.bf16.mxu0 0
        %658 = vmatpush1.bf16.msra.mxu0 %v642
        %659 = vmatprep.subr.bf16.mxu0 0
        %660 = vmatpush1.bf16.msra.mxu0 %v641
        %661 = vmatprep.subr.bf16.mxu0 0
        %662 = vmatpush1.bf16.msra.mxu0 %v640
        %663 = vmatprep.subr.bf16.mxu0 0
        %664 = vmatpush1.bf16.msra.mxu0 %v639
        %665 = vmatprep.subr.bf16.mxu0 0
        %666 = vmatpush1.bf16.msra.mxu0 %v638
        %667 = vmatprep.subr.bf16.mxu0 0
        %668 = vmatpush1.bf16.msra.mxu0 %v637
        %669 = vmatprep.subr.bf16.mxu0 0
        %670 = vmatpush2.bf16.msra.mxu0 0
        %671 = vmatprep.subr.bf16.mxu0 0
        %672 = vmatpush2.bf16.msra.mxu0 0
        %673 = vmatprep.subr.bf16.mxu0 0
        %674 = vmatpush2.bf16.msra.mxu0 0
        %675 = vmatprep.subr.bf16.mxu0 0
        %676 = vmatpush2.bf16.msra.mxu0 0
        %677 = vmatprep.subr.bf16.mxu0 0
        %678 = vmatpush2.bf16.msra.mxu0 0
        %679 = vmatprep.subr.bf16.mxu0 0
        %680 = vmatpush2.bf16.msra.mxu0 0
        %681 = vmatprep.subr.bf16.mxu0 0
        %682 = vmatpush2.bf16.msra.mxu0 0
        %683 = vmatprep.subr.bf16.mxu0 0
        %684 = vmatpush2.bf16.msra.mxu0 0
        %685 = vmatprep.mubr.bf16.mxu0 0
        %686 = vmatmul.mubr.bf16.gmra.mxu0 %v581
        %v687 = vpop.f32.mrf.mxu0
        %v688 = vadd.f32 %v603, %v687
        %v689 = vpop.f32.mrf.mxu0
        %v690 = vpop.f32.mrf.mxu0
        %v691 = vadd.f32 %v603, %v690
        %v692 = vpop.f32.mrf.mxu0
        %693 = vdwg.mxu0
        %v694 = vadd.f32 %v688, 3.0
        %v695 = vadd.f32 %v691, 3.0
        %v696 = vmax.f32 %v694, 0.0
        %v697 = vmax.f32 %v695, 0.0
        %v698 = vmin.f32 %v696, 6.0
        %v699 = vmin.f32 %v697, 6.0
        %v700 = vmul.f32 %v698, 0.16666667
        %v701 = vmul.f32 %v699, 0.16666667
        %v702 = vmul.f32 %v700, %v688
        %v703 = vmul.f32 %v701, %v691
        %v704 = vpack.c.bf16 %v703, %v702
        %v705 = vld [vmem:[#allocation5] sm:$0xf]
        %v706 = vld [vmem:[#allocation5 + $0x4] sm:$0xf]
        %v707 = vld [vmem:[#allocation5 + $0x8] sm:$0xf]
        %v708 = vld [vmem:[#allocation5 + $0xc] sm:$0xf]
        %v709 = vld [vmem:[#allocation5 + $0x10] sm:$0xf]
        %v710 = vld [vmem:[#allocation5 + $0x14] sm:$0xf]
        %v711 = vld [vmem:[#allocation5 + $0x18] sm:$0xf]
        %v712 = vld [vmem:[#allocation5 + $0x1c] sm:$0xf]
        %v713 = vld [vmem:[#allocation5 + $0x20] sm:$0xf]
        %v714 = vld [vmem:[#allocation5 + $0x24] sm:$0xf]
        %v715 = vld [vmem:[#allocation5 + $0x28] sm:$0xf]
        %v716 = vld [vmem:[#allocation5 + $0x2c] sm:$0xf]
        %v717 = vld [vmem:[#allocation5 + $0x30] sm:$0xf]
        %v718 = vld [vmem:[#allocation5 + $0x34] sm:$0xf]
        %v719 = vld [vmem:[#allocation5 + $0x38] sm:$0xf]
        %v720 = vld [vmem:[#allocation5 + $0x3c] sm:$0xf]
        %v721 = vld [vmem:[#allocation7] sm:$0xf]
        %v722 = vld [vmem:[#allocation7 + $0x4] sm:$0xf]
        %v723 = vld [vmem:[#allocation7 + $0x8] sm:$0xf]
        %v724 = vld [vmem:[#allocation7 + $0xc] sm:$0xf]
        %v725 = vld [vmem:[#allocation7 + $0x10] sm:$0xf]
        %v726 = vld [vmem:[#allocation7 + $0x14] sm:$0xf]
        %v727 = vld [vmem:[#allocation7 + $0x18] sm:$0xf]
        %v728 = vld [vmem:[#allocation7 + $0x1c] sm:$0xf]
        %v729 = vld [vmem:[#allocation7 + $0x20] sm:$0xf]
        %v730 = vld [vmem:[#allocation7 + $0x24] sm:$0xf]
        %v731 = vld [vmem:[#allocation7 + $0x28] sm:$0xf]
        %v732 = vld [vmem:[#allocation7 + $0x2c] sm:$0xf]
        %v733 = vld [vmem:[#allocation7 + $0x30] sm:$0xf]
        %v734 = vld [vmem:[#allocation7 + $0x34] sm:$0xf]
        %v735 = vld [vmem:[#allocation7 + $0x38] sm:$0xf]
        %v736 = vld [vmem:[#allocation7 + $0x3c] sm:$0xf]
        %v753 = vunpack.c.l.b16 %v721
        %v754 = vunpack.c.l.b16 %v722
        %v755 = vunpack.c.l.b16 %v723
        %v756 = vunpack.c.l.b16 %v724
        %v757 = vunpack.c.l.b16 %v725
        %v758 = vunpack.c.l.b16 %v726
        %v759 = vunpack.c.l.b16 %v727
        %v760 = vunpack.c.l.b16 %v728
        %v761 = vunpack.c.l.b16 %v729
        %v762 = vunpack.c.l.b16 %v730
        %v763 = vunpack.c.l.b16 %v731
        %v764 = vunpack.c.l.b16 %v732
        %v765 = vunpack.c.l.b16 %v733
        %v766 = vunpack.c.l.b16 %v734
        %v767 = vunpack.c.l.b16 %v735
        %v768 = vunpack.c.l.b16 %v736
        %v769 = vpack.c.b16 %v754, %v753
        %v770 = vpack.c.b16 %v756, %v755
        %v771 = vpack.c.b16 %v758, %v757
        %v772 = vpack.c.b16 %v760, %v759
        %v773 = vpack.c.b16 %v762, %v761
        %v774 = vpack.c.b16 %v764, %v763
        %v775 = vpack.c.b16 %v766, %v765
        %v776 = vpack.c.b16 %v768, %v767
        %785 = vmatprep.subr.bf16.mxu0 0
        %786 = vmatpush1.bf16.msra.mxu0 %v776
        %787 = vmatprep.subr.bf16.mxu0 0
        %788 = vmatpush1.bf16.msra.mxu0 %v775
        %789 = vmatprep.subr.bf16.mxu0 0
        %790 = vmatpush1.bf16.msra.mxu0 %v774
        %791 = vmatprep.subr.bf16.mxu0 0
        %792 = vmatpush1.bf16.msra.mxu0 %v773
        %793 = vmatprep.subr.bf16.mxu0 0
        %794 = vmatpush1.bf16.msra.mxu0 %v772
        %795 = vmatprep.subr.bf16.mxu0 0
        %796 = vmatpush1.bf16.msra.mxu0 %v771
        %797 = vmatprep.subr.bf16.mxu0 0
        %798 = vmatpush1.bf16.msra.mxu0 %v770
        %799 = vmatprep.subr.bf16.mxu0 0
        %800 = vmatpush1.bf16.msra.mxu0 %v769
        %801 = vmatprep.subr.bf16.mxu0 0
        %802 = vmatpush2.bf16.msra.mxu0 0
        %803 = vmatprep.subr.bf16.mxu0 0
        %804 = vmatpush2.bf16.msra.mxu0 0
        %805 = vmatprep.subr.bf16.mxu0 0
        %806 = vmatpush2.bf16.msra.mxu0 0
        %807 = vmatprep.subr.bf16.mxu0 0
        %808 = vmatpush2.bf16.msra.mxu0 0
        %809 = vmatprep.subr.bf16.mxu0 0
        %810 = vmatpush2.bf16.msra.mxu0 0
        %811 = vmatprep.subr.bf16.mxu0 0
        %812 = vmatpush2.bf16.msra.mxu0 0
        %813 = vmatprep.subr.bf16.mxu0 0
        %814 = vmatpush2.bf16.msra.mxu0 0
        %815 = vmatprep.subr.bf16.mxu0 0
        %816 = vmatpush2.bf16.msra.mxu0 0
        %817 = vmatprep.mubr.bf16.mxu0 0
        %818 = vmatmul.mubr.bf16.gmra.mxu0 %v704
        %v819 = vpop.f32.mrf.mxu0
        %v820 = vadd.f32 0.0, %v819
        %v821 = vpop.f32.mrf.mxu0
        %v822 = vpop.f32.mrf.mxu0
        %v823 = vadd.f32 0.0, %v822
        %v824 = vpop.f32.mrf.mxu0
        %825 = vdwg.mxu0
        %v842 = vunpack.c.l.b16 %v705
        %v843 = vunpack.c.l.b16 %v706
        %v844 = vunpack.c.l.b16 %v707
        %v845 = vunpack.c.l.b16 %v708
        %v846 = vunpack.c.l.b16 %v709
        %v847 = vunpack.c.l.b16 %v710
        %v848 = vunpack.c.l.b16 %v711
        %v849 = vunpack.c.l.b16 %v712
        %v850 = vunpack.c.l.b16 %v713
        %v851 = vunpack.c.l.b16 %v714
        %v852 = vunpack.c.l.b16 %v715
        %v853 = vunpack.c.l.b16 %v716
        %v854 = vunpack.c.l.b16 %v717
        %v855 = vunpack.c.l.b16 %v718
        %v856 = vunpack.c.l.b16 %v719
        %v857 = vunpack.c.l.b16 %v720
        %v858 = vpack.c.b16 %v843, %v842
        %v859 = vpack.c.b16 %v845, %v844
        %v860 = vpack.c.b16 %v847, %v846
        %v861 = vpack.c.b16 %v849, %v848
        %v862 = vpack.c.b16 %v851, %v850
        %v863 = vpack.c.b16 %v853, %v852
        %v864 = vpack.c.b16 %v855, %v854
        %v865 = vpack.c.b16 %v857, %v856
        %874 = vmatprep.subr.bf16.mxu0 0
        %875 = vmatpush1.bf16.msra.mxu0 %v865
        %876 = vmatprep.subr.bf16.mxu0 0
        %877 = vmatpush1.bf16.msra.mxu0 %v864
        %878 = vmatprep.subr.bf16.mxu0 0
        %879 = vmatpush1.bf16.msra.mxu0 %v863
        %880 = vmatprep.subr.bf16.mxu0 0
        %881 = vmatpush1.bf16.msra.mxu0 %v862
        %882 = vmatprep.subr.bf16.mxu0 0
        %883 = vmatpush1.bf16.msra.mxu0 %v861
        %884 = vmatprep.subr.bf16.mxu0 0
        %885 = vmatpush1.bf16.msra.mxu0 %v860
        %886 = vmatprep.subr.bf16.mxu0 0
        %887 = vmatpush1.bf16.msra.mxu0 %v859
        %888 = vmatprep.subr.bf16.mxu0 0
        %889 = vmatpush1.bf16.msra.mxu0 %v858
        %890 = vmatprep.subr.bf16.mxu0 0
        %891 = vmatpush2.bf16.msra.mxu0 0
        %892 = vmatprep.subr.bf16.mxu0 0
        %893 = vmatpush2.bf16.msra.mxu0 0
        %894 = vmatprep.subr.bf16.mxu0 0
        %895 = vmatpush2.bf16.msra.mxu0 0
        %896 = vmatprep.subr.bf16.mxu0 0
        %897 = vmatpush2.bf16.msra.mxu0 0
        %898 = vmatprep.subr.bf16.mxu0 0
        %899 = vmatpush2.bf16.msra.mxu0 0
        %900 = vmatprep.subr.bf16.mxu0 0
        %901 = vmatpush2.bf16.msra.mxu0 0
        %902 = vmatprep.subr.bf16.mxu0 0
        %903 = vmatpush2.bf16.msra.mxu0 0
        %904 = vmatprep.subr.bf16.mxu0 0
        %905 = vmatpush2.bf16.msra.mxu0 0
        %906 = vmatprep.mubr.bf16.mxu0 0
        %907 = vmatmul.mubr.bf16.gmra.mxu0 %v581
        %v908 = vpop.f32.mrf.mxu0
        %v909 = vadd.f32 %v820, %v908
        %v910 = vpop.f32.mrf.mxu0
        %v911 = vpop.f32.mrf.mxu0
        %v912 = vadd.f32 %v823, %v911
        %v913 = vpop.f32.mrf.mxu0
        %914 = vdwg.mxu0
        %v915 = vld [vmem:[%s7] sm:$0x1]
        %v917 = vlaneseq
        %v918 = vshrl.u32 %v917, 7
        %v919 = vsub.s32 0, %v918
        %v920 = vrot.slane %v915, %v919
        %v922 = vadd.f32 %v909, %v920
        %v923 = vadd.f32 %v912, %v920
        %v924 = vadd.f32 %v922, 3.0
        %v925 = vadd.f32 %v923, 3.0
        %v926 = vmax.f32 %v924, 0.0
        %v927 = vmax.f32 %v925, 0.0
        %v928 = vmin.f32 %v926, 6.0
        %v929 = vmin.f32 %v927, 6.0
        %v930 = vmul.f32 %v928, 0.16666667
        %v931 = vmul.f32 %v929, 0.16666667
        %v932 = vmul.f32 %v930, %v922
        %v933 = vmul.f32 %v931, %v923
        %v934 = vpack.c.bf16 %v933, %v932
        %v935 = vld [vmem:[#allocation8] sm:$0xf]
        %v936 = vld [vmem:[#allocation8 + $0x4] sm:$0xf]
        %v937 = vld [vmem:[#allocation8 + $0x8] sm:$0xf]
        %v938 = vld [vmem:[#allocation8 + $0xc] sm:$0xf]
        %v939 = vld [vmem:[#allocation8 + $0x10] sm:$0xf]
        %v940 = vld [vmem:[#allocation8 + $0x14] sm:$0xf]
        %v941 = vld [vmem:[#allocation8 + $0x18] sm:$0xf]
        %v942 = vld [vmem:[#allocation8 + $0x1c] sm:$0xf]
        %v943 = vld [vmem:[#allocation8 + $0x20] sm:$0xf]
        %v944 = vld [vmem:[#allocation8 + $0x24] sm:$0xf]
        %v945 = vld [vmem:[#allocation8 + $0x28] sm:$0xf]
        %v946 = vld [vmem:[#allocation8 + $0x2c] sm:$0xf]
        %v947 = vld [vmem:[#allocation8 + $0x30] sm:$0xf]
        %v948 = vld [vmem:[#allocation8 + $0x34] sm:$0xf]
        %v949 = vld [vmem:[#allocation8 + $0x38] sm:$0xf]
        %v950 = vld [vmem:[#allocation8 + $0x3c] sm:$0xf]
        %v951 = vld [vmem:[#allocation10] sm:$0xf]
        %v952 = vld [vmem:[#allocation10 + $0x4] sm:$0xf]
        %v953 = vld [vmem:[#allocation10 + $0x8] sm:$0xf]
        %v954 = vld [vmem:[#allocation10 + $0xc] sm:$0xf]
        %v955 = vld [vmem:[#allocation10 + $0x10] sm:$0xf]
        %v956 = vld [vmem:[#allocation10 + $0x14] sm:$0xf]
        %v957 = vld [vmem:[#allocation10 + $0x18] sm:$0xf]
        %v958 = vld [vmem:[#allocation10 + $0x1c] sm:$0xf]
        %v959 = vld [vmem:[#allocation10 + $0x20] sm:$0xf]
        %v960 = vld [vmem:[#allocation10 + $0x24] sm:$0xf]
        %v961 = vld [vmem:[#allocation10 + $0x28] sm:$0xf]
        %v962 = vld [vmem:[#allocation10 + $0x2c] sm:$0xf]
        %v963 = vld [vmem:[#allocation10 + $0x30] sm:$0xf]
        %v964 = vld [vmem:[#allocation10 + $0x34] sm:$0xf]
        %v965 = vld [vmem:[#allocation10 + $0x38] sm:$0xf]
        %v966 = vld [vmem:[#allocation10 + $0x3c] sm:$0xf]
        %v983 = vunpack.c.l.b16 %v951
        %v984 = vunpack.c.l.b16 %v952
        %v985 = vunpack.c.l.b16 %v953
        %v986 = vunpack.c.l.b16 %v954
        %v987 = vunpack.c.l.b16 %v955
        %v988 = vunpack.c.l.b16 %v956
        %v989 = vunpack.c.l.b16 %v957
        %v990 = vunpack.c.l.b16 %v958
        %v991 = vunpack.c.l.b16 %v959
        %v992 = vunpack.c.l.b16 %v960
        %v993 = vunpack.c.l.b16 %v961
        %v994 = vunpack.c.l.b16 %v962
        %v995 = vunpack.c.l.b16 %v963
        %v996 = vunpack.c.l.b16 %v964
        %v997 = vunpack.c.l.b16 %v965
        %v998 = vunpack.c.l.b16 %v966
        %v999 = vpack.c.b16 %v984, %v983
        %v1000 = vpack.c.b16 %v986, %v985
        %v1001 = vpack.c.b16 %v988, %v987
        %v1002 = vpack.c.b16 %v990, %v989
        %v1003 = vpack.c.b16 %v992, %v991
        %v1004 = vpack.c.b16 %v994, %v993
        %v1005 = vpack.c.b16 %v996, %v995
        %v1006 = vpack.c.b16 %v998, %v997
        %1015 = vmatprep.subr.bf16.mxu0 0
        %1016 = vmatpush1.bf16.msra.mxu0 %v1006
        %1017 = vmatprep.subr.bf16.mxu0 0
        %1018 = vmatpush1.bf16.msra.mxu0 %v1005
        %1019 = vmatprep.subr.bf16.mxu0 0
        %1020 = vmatpush1.bf16.msra.mxu0 %v1004
        %1021 = vmatprep.subr.bf16.mxu0 0
        %1022 = vmatpush1.bf16.msra.mxu0 %v1003
        %1023 = vmatprep.subr.bf16.mxu0 0
        %1024 = vmatpush1.bf16.msra.mxu0 %v1002
        %1025 = vmatprep.subr.bf16.mxu0 0
        %1026 = vmatpush1.bf16.msra.mxu0 %v1001
        %1027 = vmatprep.subr.bf16.mxu0 0
        %1028 = vmatpush1.bf16.msra.mxu0 %v1000
        %1029 = vmatprep.subr.bf16.mxu0 0
        %1030 = vmatpush1.bf16.msra.mxu0 %v999
        %1031 = vmatprep.subr.bf16.mxu0 0
        %1032 = vmatpush2.bf16.msra.mxu0 0
        %1033 = vmatprep.subr.bf16.mxu0 0
        %1034 = vmatpush2.bf16.msra.mxu0 0
        %1035 = vmatprep.subr.bf16.mxu0 0
        %1036 = vmatpush2.bf16.msra.mxu0 0
        %1037 = vmatprep.subr.bf16.mxu0 0
        %1038 = vmatpush2.bf16.msra.mxu0 0
        %1039 = vmatprep.subr.bf16.mxu0 0
        %1040 = vmatpush2.bf16.msra.mxu0 0
        %1041 = vmatprep.subr.bf16.mxu0 0
        %1042 = vmatpush2.bf16.msra.mxu0 0
        %1043 = vmatprep.subr.bf16.mxu0 0
        %1044 = vmatpush2.bf16.msra.mxu0 0
        %1045 = vmatprep.subr.bf16.mxu0 0
        %1046 = vmatpush2.bf16.msra.mxu0 0
        %1047 = vmatprep.mubr.bf16.mxu0 0
        %1048 = vmatmul.mubr.bf16.gmra.mxu0 %v704
        %v1049 = vpop.f32.mrf.mxu0
        %v1050 = vadd.f32 0.0, %v1049
        %v1051 = vpop.f32.mrf.mxu0
        %v1052 = vpop.f32.mrf.mxu0
        %v1053 = vadd.f32 0.0, %v1052
        %v1054 = vpop.f32.mrf.mxu0
        %1055 = vdwg.mxu0
        %v1072 = vunpack.c.l.b16 %v935
        %v1073 = vunpack.c.l.b16 %v936
        %v1074 = vunpack.c.l.b16 %v937
        %v1075 = vunpack.c.l.b16 %v938
        %v1076 = vunpack.c.l.b16 %v939
        %v1077 = vunpack.c.l.b16 %v940
        %v1078 = vunpack.c.l.b16 %v941
        %v1079 = vunpack.c.l.b16 %v942
        %v1080 = vunpack.c.l.b16 %v943
        %v1081 = vunpack.c.l.b16 %v944
        %v1082 = vunpack.c.l.b16 %v945
        %v1083 = vunpack.c.l.b16 %v946
        %v1084 = vunpack.c.l.b16 %v947
        %v1085 = vunpack.c.l.b16 %v948
        %v1086 = vunpack.c.l.b16 %v949
        %v1087 = vunpack.c.l.b16 %v950
        %v1088 = vpack.c.b16 %v1073, %v1072
        %v1089 = vpack.c.b16 %v1075, %v1074
        %v1090 = vpack.c.b16 %v1077, %v1076
        %v1091 = vpack.c.b16 %v1079, %v1078
        %v1092 = vpack.c.b16 %v1081, %v1080
        %v1093 = vpack.c.b16 %v1083, %v1082
        %v1094 = vpack.c.b16 %v1085, %v1084
        %v1095 = vpack.c.b16 %v1087, %v1086
        %1104 = vmatprep.subr.bf16.mxu0 0
        %1105 = vmatpush1.bf16.msra.mxu0 %v1095
        %1106 = vmatprep.subr.bf16.mxu0 0
        %1107 = vmatpush1.bf16.msra.mxu0 %v1094
        %1108 = vmatprep.subr.bf16.mxu0 0
        %1109 = vmatpush1.bf16.msra.mxu0 %v1093
        %1110 = vmatprep.subr.bf16.mxu0 0
        %1111 = vmatpush1.bf16.msra.mxu0 %v1092
        %1112 = vmatprep.subr.bf16.mxu0 0
        %1113 = vmatpush1.bf16.msra.mxu0 %v1091
        %1114 = vmatprep.subr.bf16.mxu0 0
        %1115 = vmatpush1.bf16.msra.mxu0 %v1090
        %1116 = vmatprep.subr.bf16.mxu0 0
        %1117 = vmatpush1.bf16.msra.mxu0 %v1089
        %1118 = vmatprep.subr.bf16.mxu0 0
        %1119 = vmatpush1.bf16.msra.mxu0 %v1088
        %1120 = vmatprep.subr.bf16.mxu0 0
        %1121 = vmatpush2.bf16.msra.mxu0 0
        %1122 = vmatprep.subr.bf16.mxu0 0
        %1123 = vmatpush2.bf16.msra.mxu0 0
        %1124 = vmatprep.subr.bf16.mxu0 0
        %1125 = vmatpush2.bf16.msra.mxu0 0
        %1126 = vmatprep.subr.bf16.mxu0 0
        %1127 = vmatpush2.bf16.msra.mxu0 0
        %1128 = vmatprep.subr.bf16.mxu0 0
        %1129 = vmatpush2.bf16.msra.mxu0 0
        %1130 = vmatprep.subr.bf16.mxu0 0
        %1131 = vmatpush2.bf16.msra.mxu0 0
        %1132 = vmatprep.subr.bf16.mxu0 0
        %1133 = vmatpush2.bf16.msra.mxu0 0
        %1134 = vmatprep.subr.bf16.mxu0 0
        %1135 = vmatpush2.bf16.msra.mxu0 0
        %1136 = vmatprep.mubr.bf16.mxu0 0
        %1137 = vmatmul.mubr.bf16.gmra.mxu0 %v581
        %v1138 = vpop.f32.mrf.mxu0
        %v1139 = vadd.f32 %v1050, %v1138
        %v1140 = vpop.f32.mrf.mxu0
        %v1141 = vpop.f32.mrf.mxu0
        %v1142 = vadd.f32 %v1053, %v1141
        %v1143 = vpop.f32.mrf.mxu0
        %1144 = vdwg.mxu0
        %v1145 = vld [vmem:[#allocation11] sm:$0xf]
        %v1146 = vld [vmem:[#allocation11 + $0x4] sm:$0xf]
        %v1147 = vld [vmem:[#allocation11 + $0x8] sm:$0xf]
        %v1148 = vld [vmem:[#allocation11 + $0xc] sm:$0xf]
        %v1149 = vld [vmem:[#allocation11 + $0x10] sm:$0xf]
        %v1150 = vld [vmem:[#allocation11 + $0x14] sm:$0xf]
        %v1151 = vld [vmem:[#allocation11 + $0x18] sm:$0xf]
        %v1152 = vld [vmem:[#allocation11 + $0x1c] sm:$0xf]
        %v1153 = vld [vmem:[#allocation11 + $0x20] sm:$0xf]
        %v1154 = vld [vmem:[#allocation11 + $0x24] sm:$0xf]
        %v1155 = vld [vmem:[#allocation11 + $0x28] sm:$0xf]
        %v1156 = vld [vmem:[#allocation11 + $0x2c] sm:$0xf]
        %v1157 = vld [vmem:[#allocation11 + $0x30] sm:$0xf]
        %v1158 = vld [vmem:[#allocation11 + $0x34] sm:$0xf]
        %v1159 = vld [vmem:[#allocation11 + $0x38] sm:$0xf]
        %v1160 = vld [vmem:[#allocation11 + $0x3c] sm:$0xf]
        %v1177 = vunpack.c.l.b16 %v1145
        %v1178 = vunpack.c.l.b16 %v1146
        %v1179 = vunpack.c.l.b16 %v1147
        %v1180 = vunpack.c.l.b16 %v1148
        %v1181 = vunpack.c.l.b16 %v1149
        %v1182 = vunpack.c.l.b16 %v1150
        %v1183 = vunpack.c.l.b16 %v1151
        %v1184 = vunpack.c.l.b16 %v1152
        %v1185 = vunpack.c.l.b16 %v1153
        %v1186 = vunpack.c.l.b16 %v1154
        %v1187 = vunpack.c.l.b16 %v1155
        %v1188 = vunpack.c.l.b16 %v1156
        %v1189 = vunpack.c.l.b16 %v1157
        %v1190 = vunpack.c.l.b16 %v1158
        %v1191 = vunpack.c.l.b16 %v1159
        %v1192 = vunpack.c.l.b16 %v1160
        %v1193 = vpack.c.b16 %v1178, %v1177
        %v1194 = vpack.c.b16 %v1180, %v1179
        %v1195 = vpack.c.b16 %v1182, %v1181
        %v1196 = vpack.c.b16 %v1184, %v1183
        %v1197 = vpack.c.b16 %v1186, %v1185
        %v1198 = vpack.c.b16 %v1188, %v1187
        %v1199 = vpack.c.b16 %v1190, %v1189
        %v1200 = vpack.c.b16 %v1192, %v1191
        %1209 = vmatprep.subr.bf16.mxu0 0
        %1210 = vmatpush1.bf16.msra.mxu0 %v1200
        %1211 = vmatprep.subr.bf16.mxu0 0
        %1212 = vmatpush1.bf16.msra.mxu0 %v1199
        %1213 = vmatprep.subr.bf16.mxu0 0
        %1214 = vmatpush1.bf16.msra.mxu0 %v1198
        %1215 = vmatprep.subr.bf16.mxu0 0
        %1216 = vmatpush1.bf16.msra.mxu0 %v1197
        %1217 = vmatprep.subr.bf16.mxu0 0
        %1218 = vmatpush1.bf16.msra.mxu0 %v1196
        %1219 = vmatprep.subr.bf16.mxu0 0
        %1220 = vmatpush1.bf16.msra.mxu0 %v1195
        %1221 = vmatprep.subr.bf16.mxu0 0
        %1222 = vmatpush1.bf16.msra.mxu0 %v1194
        %1223 = vmatprep.subr.bf16.mxu0 0
        %1224 = vmatpush1.bf16.msra.mxu0 %v1193
        %1225 = vmatprep.subr.bf16.mxu0 0
        %1226 = vmatpush2.bf16.msra.mxu0 0
        %1227 = vmatprep.subr.bf16.mxu0 0
        %1228 = vmatpush2.bf16.msra.mxu0 0
        %1229 = vmatprep.subr.bf16.mxu0 0
        %1230 = vmatpush2.bf16.msra.mxu0 0
        %1231 = vmatprep.subr.bf16.mxu0 0
        %1232 = vmatpush2.bf16.msra.mxu0 0
        %1233 = vmatprep.subr.bf16.mxu0 0
        %1234 = vmatpush2.bf16.msra.mxu0 0
        %1235 = vmatprep.subr.bf16.mxu0 0
        %1236 = vmatpush2.bf16.msra.mxu0 0
        %1237 = vmatprep.subr.bf16.mxu0 0
        %1238 = vmatpush2.bf16.msra.mxu0 0
        %1239 = vmatprep.subr.bf16.mxu0 0
        %1240 = vmatpush2.bf16.msra.mxu0 0
        %1241 = vmatprep.mubr.bf16.mxu0 0
        %1242 = vmatmul.mubr.bf16.gmra.mxu0 %v934
        %v1243 = vpop.f32.mrf.mxu0
        %v1244 = vadd.f32 0.0, %v1243
        %v1245 = vpop.f32.mrf.mxu0
        %v1246 = vpop.f32.mrf.mxu0
        %v1247 = vadd.f32 0.0, %v1246
        %v1248 = vpop.f32.mrf.mxu0
        %1249 = vdwg.mxu0
        %v1250 = vadd.f32 %v1139, %v1244
        %v1251 = vadd.f32 %v1142, %v1247
        %v1252 = vld [vmem:[%s11] sm:$0x1]
        %v1254 = vlaneseq
        %v1255 = vshrl.u32 %v1254, 7
        %v1256 = vsub.s32 0, %v1255
        %v1257 = vrot.slane %v1252, %v1256
        %v1259 = vadd.f32 %v1250, %v1257
        %v1260 = vadd.f32 %v1251, %v1257
        %1261 = vst [vmem:[%s495] sm:$0xff] %v1259
        %1262 = vst [vmem:[%s495 + $0x8] sm:$0xff] %v1260
        %s1263 = sand.u32 %s295, 1
        %s1264 = scalar_lea.sflag [#allocation4], %s1263
        %s1265 = sand.u32 %s295, 1
        %s1266 = smul.addr %s1265, 16
        %s1267 = scalar_lea.vmem [#allocation13], %s1266
        // Predicated region
        $region93: #{tpu_custom_call.1} parent=67 // pred_check
          %p1268 = pneg %p305
        $region94: #{tpu_custom_call.1} parent=67 // pred_check_branch
          %1270 = sbr.rel (%p1268) target = $region96
        $region95: #{tpu_custom_call.1} parent=67 // pred_region
          %s1271 = smul.u32 2, %s30
          %s1273 = ssub.s32 256, 256
          %1274 = vsyncadd %s1264, %s1273
          %s1275 = smul.addr %s1271, 128
          %s1276 = scalar_lea.hbm %s12, %s1275
          %s1277 = sshll.u32 %s1267, 4
          %s1278 = int_to_ptr.vmem [resolvable:$true] %s1277
          %1283 = dma.vmem_to_hbm [thread:$0]  %s1278, 256, %s1276, %s1264, 128, 128, 8
        $region96: #{tpu_custom_call.1} parent=67 // pred_fallthru
          _
      $region68: #{tpu_custom_call.1} parent=5 // pred_fallthru
        _
      %p1284 = scmp.le.s32.totalorder 2, %s25
      // Predicated region
      $region97: #{tpu_custom_call.1} parent=5 // pred_check
        %p1285 = pneg %p1284
      $region98: #{tpu_custom_call.1} parent=5 // pred_check_branch
        %1287 = sbr.rel (%p1285) target = $region100
      $region99: #{tpu_custom_call.1} parent=5 // pred_region
        %s1288 = ssub.s32 %s25, 2
        // Predicated region
        $region101: #{tpu_custom_call.1} parent=99 // pred_check
          %p1289 = pneg %p311
        $region102: #{tpu_custom_call.1} parent=99 // pred_check_branch
          %1291 = sbr.rel (%p1289) target = $region104
        $region103: #{tpu_custom_call.1} parent=99 // pred_region
          %s1292 = sand.u32 %s296, 1
          %s1293 = scalar_lea.sflag [#allocation4], %s1292
          %s1294 = sand.u32 %s296, 1
          %s1295 = smul.addr %s1294, 16
          %s1296 = scalar_lea.vmem [#allocation13], %s1295
          %1297 = dma.done %s1293, 256
        $region104: #{tpu_custom_call.1} parent=99 // pred_fallthru
          _
      $region100: #{tpu_custom_call.1} parent=5 // pred_fallthru
        _
    $region6: #{tpu_custom_call.1} parent=1 // loop_footer
      %s29 = sadd.s32 1, %s25
    $region7: #{tpu_custom_call.1} parent=1 // loop_footer_branch
      %24 = sbr.rel target = $region3
    $region8: #{tpu_custom_call.1} parent=1 // loop_exit
      _
    %1298 = vsyncpa [#allocation3], 1
    %s1299 = scalar_lea.sflag [#allocation3], 1
    %1300 = vsyncpa %s1299, 1
    %1301 = vsyncpa [#allocation6], 1
    %1302 = vsyncpa [#allocation9], 1
    %1303 = vsyncpa [#allocation12], 1
    %1304 = vsyncpa [#allocation4], 1
    %s1305 = scalar_lea.sflag [#allocation4], 1
    %1306 = vsyncpa %s1305, 1

</llo_original>
